<compile_context>
chip_gen: v5e
topology: v5e:2x2
jax: 0.10.0
libtpu: 0.0.40
codegen_flags: <defaults>
</compile_context>

<pallas_src>
import jax
import jax.numpy as jnp
from jax.experimental import pallas as pl
from jax.experimental.pallas import tpu as pltpu


def _round_up(x: int, m: int) -> int:
    return ((x + m - 1) // m) * m


def _num_tensorcores() -> int:
    """Best-effort TensorCore count (v7x megacore); falls back to 1 (v5e/v6e)."""
    try:
        info = pltpu.get_tpu_info()
    except Exception:
        return 1
    for attr in ("num_tensorcores", "tensorcore_count", "num_cores", "core_count"):
        v = getattr(info, attr, None)
        try:
            v = int(v)
        except (TypeError, ValueError):
            continue
        if 1 <= v <= 16:
            return v
    return 1


def _make_car_kernel(num_classes: int, feat_ch_padded: int, pix: int, tg: int):
    NC, CP, P, TG = num_classes, feat_ch_padded, pix, tg
    inv_nc = 1.0 / float(NC)

    def kernel(invnz_ref,                    # SMEM (P*NC,) f32 — scalar prefetch
               lbl_ref, feat_ref,            # VMEM: [P, TG] i32, [P, CP, TG] f32
               intra_ref, c2c_ref, inter_ref,    # outputs, (1, 1, 1) blocks
               acc_intra, acc_c2c, acc_inter):   # VMEM scratch accumulators
        inner = pl.program_id(1)

        @pl.when(inner == 0)
        def _init():
            acc_intra[...] = jnp.zeros_like(acc_intra)
            acc_c2c[...] = jnp.zeros_like(acc_c2c)
            acc_inter[...] = jnp.zeros_like(acc_inter)

        feat = feat_ref[...]                               # [P, CP, TG] f32, groups on lanes
        lbl = lbl_ref[...]                                 # [P, TG] int32 class ids

        # SMEM scalar divisors (divide_no_nan reciprocals), indexed by window position p.
        invnz = [[invnz_ref[p * NC + n] for n in range(NC)] for p in range(P)]

        feats = [feat[p] for p in range(P)]                # each [CP, TG] (sublane aligned)
        lbl_rows = [lbl[p:p + 1] for p in range(P)]        # each [1, TG]
        lbl_full = [jnp.broadcast_to(lbl_rows[p], (CP, TG)) for p in range(P)]
        mask_c = [[lbl_full[p] == n for n in range(NC)] for p in range(P)]   # [CP, TG] bool
        mask_1 = [[lbl_rows[p] == n for n in range(NC)] for p in range(P)]   # [1, TG]  bool

        # ---- class centers: cc[n][c, g] = sum_p [lbl[p,g]==n] * invnz[p,n] * feat[p,c,g] ----
        cc = []
        for n in range(NC):
            acc = None
            for p in range(P):
                term = jnp.where(mask_c[p][n], invnz[p][n], 0.0) * feats[p]
                acc = term if acc is None else acc + term
            cc.append(acc)                                 # [CP, TG]

        # ---- intra_c2p: sum_{p,c,g} (feat[p] - cc[lbl[p]])^2  (one-hot -> select chain) ----
        intra_sq = None
        for p in range(P):
            recon = cc[NC - 1]
            for n in range(NC - 2, -1, -1):
                recon = jnp.where(mask_c[p][n], cc[n], recon)
            d = feats[p] - recon
            sq = d * d
            intra_sq = sq if intra_sq is None else intra_sq + sq
        acc_intra[...] += intra_sq

        # Lane-row dot product: [CP,TG] x [CP,TG] -> [1,TG]; never packed into [NC,TG].
        def dot(a, b):
            return jnp.sum(a * b, axis=0, keepdims=True)

        c_diag = [dot(cc[n], cc[n]) for n in range(NC)]    # gram[n, n]

        # ---- c2c: sum_{n!=m} gram^2 = 2 * sum_{n<m} gram^2 ; the 1/NC factor at finalize ----
        if NC > 1:
            c2c_sq = None
            for n in range(NC):
                for m in range(n + 1, NC):
                    g_nm = dot(cc[n], cc[m])
                    sq = g_nm * g_nm
                    c2c_sq = sq if c2c_sq is None else c2c_sq + sq
            acc_c2c[...] += 2.0 * c2c_sq

        # ---- inter_c2p: softmax over classes of select(lbl==n, diag, scores+diag);
        #      MSE of (n != lbl) * softmax against (n != lbl) / NC. ----
        inter_sq = None
        for p in range(P):
            rows = []
            for n in range(NC):
                s_n = dot(cc[n], feats[p])                 # scores[p, n]  : [1, TG]
                rows.append(jnp.where(mask_1[p][n], c_diag[n], s_n + c_diag[n]))
            m = rows[0]
            for n in range(1, NC):
                m = jnp.maximum(m, rows[n])
            exps = [jnp.exp(r - m) for r in rows]
            denom = exps[0]
            for n in range(1, NC):
                denom = denom + exps[n]
            inv_denom = pl.reciprocal(denom, approx=False)  # exact: padded groups stay 0
            for n in range(NC):
                dd = jnp.where(mask_1[p][n], 0.0, exps[n] * inv_denom - inv_nc)
                sq = dd * dd
                inter_sq = sq if inter_sq is None else inter_sq + sq
        acc_inter[...] += inter_sq

        # ---- collapse to scalars only once, at the last inner step ----
        @pl.when(inner == pl.num_programs(1) - 1)
        def _finalize():
            intra_ref[...] = jnp.sum(acc_intra[...]).reshape(1, 1, 1)
            c2c_ref[...] = (jnp.sum(acc_c2c[...]) * inv_nc).reshape(1, 1, 1)
            inter_ref[...] = jnp.sum(acc_inter[...]).reshape(1, 1, 1)

    return kernel


def car_loss_pallas(y_pred, y_true, *, num_classes: int = 6, window_size: int = 2,
                    tile_groups: int = 8192, n_outer=None):
    """y_pred: [B, C, H, W] float32, y_true: [B, H, W] int labels. Returns scalar loss."""
    B, C, H, W = y_pred.shape
    NC, ws = num_classes, window_size
    assert tuple(y_true.shape) == (B, H, W)
    assert H % ws == 0 and W % ws == 0
    h, w = H // ws, W // ws
    P = ws * ws
    G = B * h * w

    y_pred = y_pred.astype(jnp.float32)
    y_true = y_true.astype(jnp.int32)

    # non_zero_map[b, n] = # pixels of class n in image b (no one-hot materialized).
    nz = jnp.sum(y_true[:, :, :, None] == jnp.arange(NC, dtype=jnp.int32),
                 axis=(1, 2)).astype(jnp.float32)                     # [B, NC]
    inv_nz = jnp.where(nz != 0.0, 1.0 / nz, 0.0)                      # divide_no_nan

    # PyTorch broadcast quirk: label[G,P,NC] / non_zero_map[B,NC] requires B == P (or B == 1);
    # the divisor is indexed by window position p, not the group's true batch index.
    if B == P:
        inv_nz_p = inv_nz
    elif B == 1:
        inv_nz_p = jnp.broadcast_to(inv_nz, (P, NC))
    else:
        raise ValueError("Reference broadcasting requires batch == window_size**2 or batch == 1")
    inv_nz_flat = inv_nz_p.reshape(P * NC)

    # Channel pad to a sublane multiple so per-p slices of the feature block are tile aligned.
    CP = _round_up(C, 8)
    if CP != C:
        y_pred = jnp.pad(y_pred, ((0, 0), (0, CP - C), (0, 0), (0, 0)))

    # Window-major, GROUP-ON-LANES relayout (one XLA transpose each; reshapes are free):
    #   feat_pg[p, c, g], lbl_pg[p, g]   with p = hsp*ws + wsp, g = (b*h + hi)*w + wi
    # TODO(synk): fold this transpose into the kernel (in-kernel strided reshuffle) to save
    # the extra HBM pass on v5e/v6e.
    feat_pg = jnp.transpose(y_pred.reshape(B, CP, h, ws, w, ws),
                            (3, 5, 1, 0, 2, 4)).reshape(P, CP, G)
    lbl_pg = jnp.transpose(y_true.reshape(B, h, ws, w, ws),
                           (2, 4, 0, 1, 3)).reshape(P, G)

    # Lane-dense tiling of G with zero padding (loss-neutral: padded feat is all-zero,
    # padded labels default to class 0 — see padding invariant at top of file).
    tc = _num_tensorcores() if n_outer is None else max(1, int(n_outer))
    TG = _round_up(min(tile_groups, _round_up(G, 128)), 128)
    if tc > 1:   # shrink the tile if needed so every TensorCore gets at least one block
        TG = max(128, min(TG, _round_up(-(-G // tc), 128)))
    nb = -(-G // TG)
    n_out = min(tc, nb)
    nb_pad = _round_up(nb, n_out)
    n_inner = nb_pad // n_out
    G_pad = nb_pad * TG
    if G_pad != G:
        feat_pg = jnp.pad(feat_pg, ((0, 0), (0, 0), (0, G_pad - G)))
        lbl_pg = jnp.pad(lbl_pg, ((0, 0), (0, G_pad - G)))

    kernel = _make_car_kernel(NC, CP, P, TG)
    out_sd = jax.ShapeDtypeStruct((n_out, 1, 1), jnp.float32)
    out_spec = pl.BlockSpec((1, 1, 1), lambda o, i, inv: (o, 0, 0))

    intra_s, c2c_s, inter_s = pl.pallas_call(
        kernel,
        out_shape=(out_sd, out_sd, out_sd),
        grid_spec=pltpu.PrefetchScalarGridSpec(
            num_scalar_prefetch=1,                       # inv_nz -> SMEM scalars
            grid=(n_out, n_inner),
            in_specs=[
                pl.BlockSpec((P, TG), lambda o, i, inv: (0, o * n_inner + i)),
                pl.BlockSpec((P, CP, TG), lambda o, i, inv: (0, 0, o * n_inner + i)),
            ],
            out_specs=(out_spec, out_spec, out_spec),
            scratch_shapes=[
                pltpu.VMEM((CP, TG), jnp.float32),       # intra accumulator (lane-shaped)
                pltpu.VMEM((1, TG), jnp.float32),        # c2c accumulator
                pltpu.VMEM((1, TG), jnp.float32),        # inter accumulator
            ],
        ),
        compiler_params=pltpu.CompilerParams(
            dimension_semantics=("parallel", "arbitrary")),
    )(inv_nz_flat, lbl_pg, feat_pg)

    # MSE divisors use the UNPADDED G and true channel count C.
    intra_c2p_loss = jnp.sum(intra_s) / (G * P * C)
    c2c_loss = jnp.sum(c2c_s) / (G * NC * NC)
    inter_c2p_loss = jnp.sum(inter_s) / (G * P * NC)
    return intra_c2p_loss + c2c_loss + inter_c2p_loss


def car_loss_ref(y_pred, y_true, *, num_classes: int = 6, window_size: int = 2):
    """Pure-JAX reference mirroring the PyTorch forward (for self-check)."""
    B, C, H, W = y_pred.shape
    NC, ws = num_classes, window_size
    h, w = H // ws, W // ws
    P = ws * ws
    G = B * h * w
    oh = jax.nn.one_hot(y_true.astype(jnp.int32), NC, dtype=jnp.float32)
    lab = jnp.transpose(oh, (0, 3, 1, 2))
    nz = jnp.sum((lab.reshape(B, NC, H * W) != 0).astype(jnp.float32), axis=-1)

    def blockify(x):
        Cx = x.shape[1]
        return jnp.transpose(x.reshape(B, Cx, h, ws, w, ws),
                             (0, 2, 4, 3, 5, 1)).reshape(G, P, Cx)

    feat = blockify(y_pred.astype(jnp.float32))
    label = blockify(lab)
    label_scale = jnp.where(nz != 0, label / nz, 0.0)          # relies on B == P (or 1)
    cc = jnp.einsum("gpn,gpc->gnc", label_scale, feat)
    intra = jnp.mean((feat - jnp.einsum("gpn,gnc->gpc", label, cc)) ** 2)
    gram = jnp.einsum("gnc,gmc->gnm", cc, cc)
    d_c2c = (1.0 - jnp.eye(NC)) * (gram * NC ** (-0.5))
    c2c = jnp.mean(d_c2c ** 2)
    scores = jnp.einsum("gpc,gnc->gpn", feat, cc)
    c_diag = jnp.einsum("gnn->gn", gram)
    c2p = jax.nn.softmax((1.0 - label) * scores + c_diag[:, None, :], axis=-1)
    inter = jnp.mean(((1.0 - label) * c2p - (1.0 - label) / NC) ** 2)
    return intra + c2c + inter


if __name__ == "__main__":
    import numpy as np

    key = jax.random.PRNGKey(0)
    k1, k2, k3 = jax.random.split(key, 3)

    # B must equal window_size**2 (=4) to match the reference's broadcasting quirk.
    B, C, H, W = 4, 6, 16, 16
    NUM_CLASSES = 6
    y_pred = jax.random.normal(k1, (B, C, H, W), dtype=jnp.float32)
    y_true = jax.random.randint(k2, (B, H, W), 0, NUM_CLASSES)

    # Deterministic init of the module's nn.Conv2d(6, 512, 1) parameters.
    # apply_filter=False in the default config, so they are NOT used in forward.
    filter_w = jax.random.normal(k3, (512, NUM_CLASSES, 1, 1), dtype=jnp.float32) * 0.01
    filter_b = jnp.zeros((512,), dtype=jnp.float32)
    # TODO(synk): wire the 1x1 conv (apply_filter=True, C=512) into the kernel path if needed.

    ref = car_loss_ref(y_pred, y_true, num_classes=NUM_CLASSES, window_size=2)

    # Default tiling: single lane-dense tile for this small G (TG rounds to 256).
    loss = car_loss_pallas(y_pred, y_true, num_classes=NUM_CLASSES, window_size=2)
    loss = jax.block_until_ready(loss)
    assert np.allclose(np.asarray(loss), np.asarray(ref), rtol=2e-3, atol=2e-3), (loss, ref)

    # Small tiles: exercises the multi-block accumulation path (grid inner axis > 1).
    loss_mb = car_loss_pallas(y_pred, y_true, num_classes=NUM_CLASSES, window_size=2,
                              tile_groups=128)
    loss_mb = jax.block_until_ready(loss_mb)
    assert np.allclose(np.asarray(loss_mb), np.asarray(ref), rtol=2e-3, atol=2e-3), (loss_mb, ref)

    print("KERNEL_OK")
</pallas_src>

<mosaic_0001>
module attributes {stable_mosaic.version = 11 : i64} {
  func.func @kernel(%arg0: i32, %arg1: i32, %arg2: memref<24xf32, #tpu.memory_space<smem>>, %arg3: memref<4x256xi32, #tpu.memory_space<vmem>>, %arg4: memref<4x8x256xf32, #tpu.memory_space<vmem>>, %arg5: memref<1x1x1xf32, #tpu.memory_space<vmem>>, %arg6: memref<1x1x1xf32, #tpu.memory_space<vmem>>, %arg7: memref<1x1x1xf32, #tpu.memory_space<vmem>>, %arg8: memref<8x256xf32, #tpu.memory_space<vmem>>, %arg9: memref<1x256xf32, #tpu.memory_space<vmem>>, %arg10: memref<1x256xf32, #tpu.memory_space<vmem>>) attributes {dimension_semantics = [#tpu.dimension_semantics<parallel>, #tpu.dimension_semantics<arbitrary>], iteration_bounds = array<i64: 1, 1>, scalar_prefetch = 1 : i64, scratch_operands = 3 : i64, tpu.core_type = #tpu.core_type<tc>, window_params = [{transform_indices = @transform_0, window_bounds = array<i64: 4, 256>}, {transform_indices = @transform_1, window_bounds = array<i64: 4, 8, 256>}, {transform_indices = @transform_2, window_bounds = array<i64: 1, 1, 1>}, {transform_indices = @transform_3, window_bounds = array<i64: 1, 1, 1>}, {transform_indices = @transform_4, window_bounds = array<i64: 1, 1, 1>}]} {
    %c0_i32 = arith.constant 0 : i32
    %0 = arith.cmpi eq, %arg1, %c0_i32 : i32
    %1 = arith.extui %0 : i1 to i32
    %c0_i32_0 = arith.constant 0 : i32
    %2 = arith.cmpi ne, %1, %c0_i32_0 : i32
    scf.if %2 {
      %cst_180 = arith.constant 0.000000e+00 : f32
      %775 = vector.broadcast %cst_180 : f32 to vector<8x256xf32>
      %c0_181 = arith.constant 0 : index
      %c0_182 = arith.constant 0 : index
      %776 = vector.load %arg8[%c0_181, %c0_182] : memref<8x256xf32, #tpu.memory_space<vmem>>, vector<8x256xf32>
      tpu.vector_store %arg8[%c0_181, %c0_182], %775 {strides = array<i32>} : memref<8x256xf32, #tpu.memory_space<vmem>>, vector<8x256xf32>,
      %cst_183 = arith.constant 0.000000e+00 : f32
      %777 = vector.broadcast %cst_183 : f32 to vector<1x256xf32>
      %c0_184 = arith.constant 0 : index
      %c0_185 = arith.constant 0 : index
      %778 = vector.load %arg9[%c0_184, %c0_185] : memref<1x256xf32, #tpu.memory_space<vmem>>, vector<1x256xf32>
      tpu.vector_store %arg9[%c0_184, %c0_185], %777 {strides = array<i32>} : memref<1x256xf32, #tpu.memory_space<vmem>>, vector<1x256xf32>,
      %cst_186 = arith.constant 0.000000e+00 : f32
      %779 = vector.broadcast %cst_186 : f32 to vector<1x256xf32>
      %c0_187 = arith.constant 0 : index
      %c0_188 = arith.constant 0 : index
      %780 = vector.load %arg10[%c0_187, %c0_188] : memref<1x256xf32, #tpu.memory_space<vmem>>, vector<1x256xf32>
      tpu.vector_store %arg10[%c0_187, %c0_188], %779 {strides = array<i32>} : memref<1x256xf32, #tpu.memory_space<vmem>>, vector<1x256xf32>,
    } else {
    }
    %c0 = arith.constant 0 : index
    %c0_1 = arith.constant 0 : index
    %c0_2 = arith.constant 0 : index
    %3 = vector.load %arg4[%c0, %c0_1, %c0_2] : memref<4x8x256xf32, #tpu.memory_space<vmem>>, vector<4x8x256xf32>
    %c0_3 = arith.constant 0 : index
    %c0_4 = arith.constant 0 : index
    %4 = vector.load %arg3[%c0_3, %c0_4] : memref<4x256xi32, #tpu.memory_space<vmem>>, vector<4x256xi32>
    %c0_5 = arith.constant 0 : index
    %5 = memref.load %arg2[%c0_5] : memref<24xf32, #tpu.memory_space<smem>>
    %c1 = arith.constant 1 : index
    %6 = memref.load %arg2[%c1] : memref<24xf32, #tpu.memory_space<smem>>
    %c2 = arith.constant 2 : index
    %7 = memref.load %arg2[%c2] : memref<24xf32, #tpu.memory_space<smem>>
    %c3 = arith.constant 3 : index
    %8 = memref.load %arg2[%c3] : memref<24xf32, #tpu.memory_space<smem>>
    %c4 = arith.constant 4 : index
    %9 = memref.load %arg2[%c4] : memref<24xf32, #tpu.memory_space<smem>>
    %c5 = arith.constant 5 : index
    %10 = memref.load %arg2[%c5] : memref<24xf32, #tpu.memory_space<smem>>
    %c6 = arith.constant 6 : index
    %11 = memref.load %arg2[%c6] : memref<24xf32, #tpu.memory_space<smem>>
    %c7 = arith.constant 7 : index
    %12 = memref.load %arg2[%c7] : memref<24xf32, #tpu.memory_space<smem>>
    %c8 = arith.constant 8 : index
    %13 = memref.load %arg2[%c8] : memref<24xf32, #tpu.memory_space<smem>>
    %c9 = arith.constant 9 : index
    %14 = memref.load %arg2[%c9] : memref<24xf32, #tpu.memory_space<smem>>
    %c10 = arith.constant 10 : index
    %15 = memref.load %arg2[%c10] : memref<24xf32, #tpu.memory_space<smem>>
    %c11 = arith.constant 11 : index
    %16 = memref.load %arg2[%c11] : memref<24xf32, #tpu.memory_space<smem>>
    %c12 = arith.constant 12 : index
    %17 = memref.load %arg2[%c12] : memref<24xf32, #tpu.memory_space<smem>>
    %c13 = arith.constant 13 : index
    %18 = memref.load %arg2[%c13] : memref<24xf32, #tpu.memory_space<smem>>
    %c14 = arith.constant 14 : index
    %19 = memref.load %arg2[%c14] : memref<24xf32, #tpu.memory_space<smem>>
    %c15 = arith.constant 15 : index
    %20 = memref.load %arg2[%c15] : memref<24xf32, #tpu.memory_space<smem>>
    %c16 = arith.constant 16 : index
    %21 = memref.load %arg2[%c16] : memref<24xf32, #tpu.memory_space<smem>>
    %c17 = arith.constant 17 : index
    %22 = memref.load %arg2[%c17] : memref<24xf32, #tpu.memory_space<smem>>
    %c18 = arith.constant 18 : index
    %23 = memref.load %arg2[%c18] : memref<24xf32, #tpu.memory_space<smem>>
    %c19 = arith.constant 19 : index
    %24 = memref.load %arg2[%c19] : memref<24xf32, #tpu.memory_space<smem>>
    %c20 = arith.constant 20 : index
    %25 = memref.load %arg2[%c20] : memref<24xf32, #tpu.memory_space<smem>>
    %c21 = arith.constant 21 : index
    %26 = memref.load %arg2[%c21] : memref<24xf32, #tpu.memory_space<smem>>
    %c22 = arith.constant 22 : index
    %27 = memref.load %arg2[%c22] : memref<24xf32, #tpu.memory_space<smem>>
    %c23 = arith.constant 23 : index
    %28 = memref.load %arg2[%c23] : memref<24xf32, #tpu.memory_space<smem>>
    %29 = vector.extract_strided_slice %3 {offsets = [0, 0, 0], sizes = [1, 8, 256], strides = [1, 1, 1]} : vector<4x8x256xf32> to vector<1x8x256xf32>
    %30 = vector.shape_cast %29 : vector<1x8x256xf32> to vector<8x256xf32>
    %31 = vector.extract_strided_slice %3 {offsets = [1, 0, 0], sizes = [1, 8, 256], strides = [1, 1, 1]} : vector<4x8x256xf32> to vector<1x8x256xf32>
    %32 = vector.shape_cast %31 : vector<1x8x256xf32> to vector<8x256xf32>
    %33 = vector.extract_strided_slice %3 {offsets = [2, 0, 0], sizes = [1, 8, 256], strides = [1, 1, 1]} : vector<4x8x256xf32> to vector<1x8x256xf32>
    %34 = vector.shape_cast %33 : vector<1x8x256xf32> to vector<8x256xf32>
    %35 = vector.extract_strided_slice %3 {offsets = [3, 0, 0], sizes = [1, 8, 256], strides = [1, 1, 1]} : vector<4x8x256xf32> to vector<1x8x256xf32>
    %36 = vector.shape_cast %35 : vector<1x8x256xf32> to vector<8x256xf32>
    %37 = vector.extract_strided_slice %4 {offsets = [0, 0], sizes = [1, 256], strides = [1, 1]} : vector<4x256xi32> to vector<1x256xi32>
    %38 = vector.extract_strided_slice %4 {offsets = [1, 0], sizes = [1, 256], strides = [1, 1]} : vector<4x256xi32> to vector<1x256xi32>
    %39 = vector.extract_strided_slice %4 {offsets = [2, 0], sizes = [1, 256], strides = [1, 1]} : vector<4x256xi32> to vector<1x256xi32>
    %40 = vector.extract_strided_slice %4 {offsets = [3, 0], sizes = [1, 256], strides = [1, 1]} : vector<4x256xi32> to vector<1x256xi32>
    %41 = vector.shape_cast %37 : vector<1x256xi32> to vector<1x256xi32>
    %42 = vector.broadcast %41 : vector<1x256xi32> to vector<8x256xi32>
    %43 = vector.shape_cast %38 : vector<1x256xi32> to vector<1x256xi32>
    %44 = vector.broadcast %43 : vector<1x256xi32> to vector<8x256xi32>
    %45 = vector.shape_cast %39 : vector<1x256xi32> to vector<1x256xi32>
    %46 = vector.broadcast %45 : vector<1x256xi32> to vector<8x256xi32>
    %47 = vector.shape_cast %40 : vector<1x256xi32> to vector<1x256xi32>
    %48 = vector.broadcast %47 : vector<1x256xi32> to vector<8x256xi32>
    %c0_i32_6 = arith.constant 0 : i32
    %49 = vector.broadcast %c0_i32_6 : i32 to vector<8x256xi32>
    %50 = arith.cmpi eq, %42, %49 : vector<8x256xi32>
    %c1_i32 = arith.constant 1 : i32
    %51 = vector.broadcast %c1_i32 : i32 to vector<8x256xi32>
    %52 = arith.cmpi eq, %42, %51 : vector<8x256xi32>
    %c2_i32 = arith.constant 2 : i32
    %53 = vector.broadcast %c2_i32 : i32 to vector<8x256xi32>
    %54 = arith.cmpi eq, %42, %53 : vector<8x256xi32>
    %c3_i32 = arith.constant 3 : i32
    %55 = vector.broadcast %c3_i32 : i32 to vector<8x256xi32>
    %56 = arith.cmpi eq, %42, %55 : vector<8x256xi32>
    %c4_i32 = arith.constant 4 : i32
    %57 = vector.broadcast %c4_i32 : i32 to vector<8x256xi32>
    %58 = arith.cmpi eq, %42, %57 : vector<8x256xi32>
    %c5_i32 = arith.constant 5 : i32
    %59 = vector.broadcast %c5_i32 : i32 to vector<8x256xi32>
    %60 = arith.cmpi eq, %42, %59 : vector<8x256xi32>
    %c0_i32_7 = arith.constant 0 : i32
    %61 = vector.broadcast %c0_i32_7 : i32 to vector<8x256xi32>
    %62 = arith.cmpi eq, %44, %61 : vector<8x256xi32>
    %c1_i32_8 = arith.constant 1 : i32
    %63 = vector.broadcast %c1_i32_8 : i32 to vector<8x256xi32>
    %64 = arith.cmpi eq, %44, %63 : vector<8x256xi32>
    %c2_i32_9 = arith.constant 2 : i32
    %65 = vector.broadcast %c2_i32_9 : i32 to vector<8x256xi32>
    %66 = arith.cmpi eq, %44, %65 : vector<8x256xi32>
    %c3_i32_10 = arith.constant 3 : i32
    %67 = vector.broadcast %c3_i32_10 : i32 to vector<8x256xi32>
    %68 = arith.cmpi eq, %44, %67 : vector<8x256xi32>
    %c4_i32_11 = arith.constant 4 : i32
    %69 = vector.broadcast %c4_i32_11 : i32 to vector<8x256xi32>
    %70 = arith.cmpi eq, %44, %69 : vector<8x256xi32>
    %c5_i32_12 = arith.constant 5 : i32
    %71 = vector.broadcast %c5_i32_12 : i32 to vector<8x256xi32>
    %72 = arith.cmpi eq, %44, %71 : vector<8x256xi32>
    %c0_i32_13 = arith.constant 0 : i32
    %73 = vector.broadcast %c0_i32_13 : i32 to vector<8x256xi32>
    %74 = arith.cmpi eq, %46, %73 : vector<8x256xi32>
    %c1_i32_14 = arith.constant 1 : i32
    %75 = vector.broadcast %c1_i32_14 : i32 to vector<8x256xi32>
    %76 = arith.cmpi eq, %46, %75 : vector<8x256xi32>
    %c2_i32_15 = arith.constant 2 : i32
    %77 = vector.broadcast %c2_i32_15 : i32 to vector<8x256xi32>
    %78 = arith.cmpi eq, %46, %77 : vector<8x256xi32>
    %c3_i32_16 = arith.constant 3 : i32
    %79 = vector.broadcast %c3_i32_16 : i32 to vector<8x256xi32>
    %80 = arith.cmpi eq, %46, %79 : vector<8x256xi32>
    %c4_i32_17 = arith.constant 4 : i32
    %81 = vector.broadcast %c4_i32_17 : i32 to vector<8x256xi32>
    %82 = arith.cmpi eq, %46, %81 : vector<8x256xi32>
    %c5_i32_18 = arith.constant 5 : i32
    %83 = vector.broadcast %c5_i32_18 : i32 to vector<8x256xi32>
    %84 = arith.cmpi eq, %46, %83 : vector<8x256xi32>
    %c0_i32_19 = arith.constant 0 : i32
    %85 = vector.broadcast %c0_i32_19 : i32 to vector<8x256xi32>
    %86 = arith.cmpi eq, %48, %85 : vector<8x256xi32>
    %c1_i32_20 = arith.constant 1 : i32
    %87 = vector.broadcast %c1_i32_20 : i32 to vector<8x256xi32>
    %88 = arith.cmpi eq, %48, %87 : vector<8x256xi32>
    %c2_i32_21 = arith.constant 2 : i32
    %89 = vector.broadcast %c2_i32_21 : i32 to vector<8x256xi32>
    %90 = arith.cmpi eq, %48, %89 : vector<8x256xi32>
    %c3_i32_22 = arith.constant 3 : i32
    %91 = vector.broadcast %c3_i32_22 : i32 to vector<8x256xi32>
    %92 = arith.cmpi eq, %48, %91 : vector<8x256xi32>
    %c4_i32_23 = arith.constant 4 : i32
    %93 = vector.broadcast %c4_i32_23 : i32 to vector<8x256xi32>
    %94 = arith.cmpi eq, %48, %93 : vector<8x256xi32>
    %c5_i32_24 = arith.constant 5 : i32
    %95 = vector.broadcast %c5_i32_24 : i32 to vector<8x256xi32>
    %96 = arith.cmpi eq, %48, %95 : vector<8x256xi32>
    %c0_i32_25 = arith.constant 0 : i32
    %97 = vector.broadcast %c0_i32_25 : i32 to vector<1x256xi32>
    %98 = arith.cmpi eq, %37, %97 : vector<1x256xi32>
    %c1_i32_26 = arith.constant 1 : i32
    %99 = vector.broadcast %c1_i32_26 : i32 to vector<1x256xi32>
    %100 = arith.cmpi eq, %37, %99 : vector<1x256xi32>
    %c2_i32_27 = arith.constant 2 : i32
    %101 = vector.broadcast %c2_i32_27 : i32 to vector<1x256xi32>
    %102 = arith.cmpi eq, %37, %101 : vector<1x256xi32>
    %c3_i32_28 = arith.constant 3 : i32
    %103 = vector.broadcast %c3_i32_28 : i32 to vector<1x256xi32>
    %104 = arith.cmpi eq, %37, %103 : vector<1x256xi32>
    %c4_i32_29 = arith.constant 4 : i32
    %105 = vector.broadcast %c4_i32_29 : i32 to vector<1x256xi32>
    %106 = arith.cmpi eq, %37, %105 : vector<1x256xi32>
    %c5_i32_30 = arith.constant 5 : i32
    %107 = vector.broadcast %c5_i32_30 : i32 to vector<1x256xi32>
    %108 = arith.cmpi eq, %37, %107 : vector<1x256xi32>
    %c0_i32_31 = arith.constant 0 : i32
    %109 = vector.broadcast %c0_i32_31 : i32 to vector<1x256xi32>
    %110 = arith.cmpi eq, %38, %109 : vector<1x256xi32>
    %c1_i32_32 = arith.constant 1 : i32
    %111 = vector.broadcast %c1_i32_32 : i32 to vector<1x256xi32>
    %112 = arith.cmpi eq, %38, %111 : vector<1x256xi32>
    %c2_i32_33 = arith.constant 2 : i32
    %113 = vector.broadcast %c2_i32_33 : i32 to vector<1x256xi32>
    %114 = arith.cmpi eq, %38, %113 : vector<1x256xi32>
    %c3_i32_34 = arith.constant 3 : i32
    %115 = vector.broadcast %c3_i32_34 : i32 to vector<1x256xi32>
    %116 = arith.cmpi eq, %38, %115 : vector<1x256xi32>
    %c4_i32_35 = arith.constant 4 : i32
    %117 = vector.broadcast %c4_i32_35 : i32 to vector<1x256xi32>
    %118 = arith.cmpi eq, %38, %117 : vector<1x256xi32>
    %c5_i32_36 = arith.constant 5 : i32
    %119 = vector.broadcast %c5_i32_36 : i32 to vector<1x256xi32>
    %120 = arith.cmpi eq, %38, %119 : vector<1x256xi32>
    %c0_i32_37 = arith.constant 0 : i32
    %121 = vector.broadcast %c0_i32_37 : i32 to vector<1x256xi32>
    %122 = arith.cmpi eq, %39, %121 : vector<1x256xi32>
    %c1_i32_38 = arith.constant 1 : i32
    %123 = vector.broadcast %c1_i32_38 : i32 to vector<1x256xi32>
    %124 = arith.cmpi eq, %39, %123 : vector<1x256xi32>
    %c2_i32_39 = arith.constant 2 : i32
    %125 = vector.broadcast %c2_i32_39 : i32 to vector<1x256xi32>
    %126 = arith.cmpi eq, %39, %125 : vector<1x256xi32>
    %c3_i32_40 = arith.constant 3 : i32
    %127 = vector.broadcast %c3_i32_40 : i32 to vector<1x256xi32>
    %128 = arith.cmpi eq, %39, %127 : vector<1x256xi32>
    %c4_i32_41 = arith.constant 4 : i32
    %129 = vector.broadcast %c4_i32_41 : i32 to vector<1x256xi32>
    %130 = arith.cmpi eq, %39, %129 : vector<1x256xi32>
    %c5_i32_42 = arith.constant 5 : i32
    %131 = vector.broadcast %c5_i32_42 : i32 to vector<1x256xi32>
    %132 = arith.cmpi eq, %39, %131 : vector<1x256xi32>
    %c0_i32_43 = arith.constant 0 : i32
    %133 = vector.broadcast %c0_i32_43 : i32 to vector<1x256xi32>
    %134 = arith.cmpi eq, %40, %133 : vector<1x256xi32>
    %c1_i32_44 = arith.constant 1 : i32
    %135 = vector.broadcast %c1_i32_44 : i32 to vector<1x256xi32>
    %136 = arith.cmpi eq, %40, %135 : vector<1x256xi32>
    %c2_i32_45 = arith.constant 2 : i32
    %137 = vector.broadcast %c2_i32_45 : i32 to vector<1x256xi32>
    %138 = arith.cmpi eq, %40, %137 : vector<1x256xi32>
    %c3_i32_46 = arith.constant 3 : i32
    %139 = vector.broadcast %c3_i32_46 : i32 to vector<1x256xi32>
    %140 = arith.cmpi eq, %40, %139 : vector<1x256xi32>
    %c4_i32_47 = arith.constant 4 : i32
    %141 = vector.broadcast %c4_i32_47 : i32 to vector<1x256xi32>
    %142 = arith.cmpi eq, %40, %141 : vector<1x256xi32>
    %c5_i32_48 = arith.constant 5 : i32
    %143 = vector.broadcast %c5_i32_48 : i32 to vector<1x256xi32>
    %144 = arith.cmpi eq, %40, %143 : vector<1x256xi32>
    %cst = arith.constant 0.000000e+00 : f32
    %145 = vector.broadcast %5 : f32 to vector<8x256xf32>
    %146 = vector.broadcast %cst : f32 to vector<8x256xf32>
    %147 = arith.select %50, %145, %146 : vector<8x256xi1>, vector<8x256xf32>
    %148 = arith.mulf %147, %30 : vector<8x256xf32>
    %cst_49 = arith.constant 0.000000e+00 : f32
    %149 = vector.broadcast %11 : f32 to vector<8x256xf32>
    %150 = vector.broadcast %cst_49 : f32 to vector<8x256xf32>
    %151 = arith.select %62, %149, %150 : vector<8x256xi1>, vector<8x256xf32>
    %152 = arith.mulf %151, %32 : vector<8x256xf32>
    %153 = arith.addf %148, %152 : vector<8x256xf32>
    %cst_50 = arith.constant 0.000000e+00 : f32
    %154 = vector.broadcast %17 : f32 to vector<8x256xf32>
    %155 = vector.broadcast %cst_50 : f32 to vector<8x256xf32>
    %156 = arith.select %74, %154, %155 : vector<8x256xi1>, vector<8x256xf32>
    %157 = arith.mulf %156, %34 : vector<8x256xf32>
    %158 = arith.addf %153, %157 : vector<8x256xf32>
    %cst_51 = arith.constant 0.000000e+00 : f32
    %159 = vector.broadcast %23 : f32 to vector<8x256xf32>
    %160 = vector.broadcast %cst_51 : f32 to vector<8x256xf32>
    %161 = arith.select %86, %159, %160 : vector<8x256xi1>, vector<8x256xf32>
    %162 = arith.mulf %161, %36 : vector<8x256xf32>
    %163 = arith.addf %158, %162 : vector<8x256xf32>
    %cst_52 = arith.constant 0.000000e+00 : f32
    %164 = vector.broadcast %6 : f32 to vector<8x256xf32>
    %165 = vector.broadcast %cst_52 : f32 to vector<8x256xf32>
    %166 = arith.select %52, %164, %165 : vector<8x256xi1>, vector<8x256xf32>
    %167 = arith.mulf %166, %30 : vector<8x256xf32>
    %cst_53 = arith.constant 0.000000e+00 : f32
    %168 = vector.broadcast %12 : f32 to vector<8x256xf32>
    %169 = vector.broadcast %cst_53 : f32 to vector<8x256xf32>
    %170 = arith.select %64, %168, %169 : vector<8x256xi1>, vector<8x256xf32>
    %171 = arith.mulf %170, %32 : vector<8x256xf32>
    %172 = arith.addf %167, %171 : vector<8x256xf32>
    %cst_54 = arith.constant 0.000000e+00 : f32
    %173 = vector.broadcast %18 : f32 to vector<8x256xf32>
    %174 = vector.broadcast %cst_54 : f32 to vector<8x256xf32>
    %175 = arith.select %76, %173, %174 : vector<8x256xi1>, vector<8x256xf32>
    %176 = arith.mulf %175, %34 : vector<8x256xf32>
    %177 = arith.addf %172, %176 : vector<8x256xf32>
    %cst_55 = arith.constant 0.000000e+00 : f32
    %178 = vector.broadcast %24 : f32 to vector<8x256xf32>
    %179 = vector.broadcast %cst_55 : f32 to vector<8x256xf32>
    %180 = arith.select %88, %178, %179 : vector<8x256xi1>, vector<8x256xf32>
    %181 = arith.mulf %180, %36 : vector<8x256xf32>
    %182 = arith.addf %177, %181 : vector<8x256xf32>
    %cst_56 = arith.constant 0.000000e+00 : f32
    %183 = vector.broadcast %7 : f32 to vector<8x256xf32>
    %184 = vector.broadcast %cst_56 : f32 to vector<8x256xf32>
    %185 = arith.select %54, %183, %184 : vector<8x256xi1>, vector<8x256xf32>
    %186 = arith.mulf %185, %30 : vector<8x256xf32>
    %cst_57 = arith.constant 0.000000e+00 : f32
    %187 = vector.broadcast %13 : f32 to vector<8x256xf32>
    %188 = vector.broadcast %cst_57 : f32 to vector<8x256xf32>
    %189 = arith.select %66, %187, %188 : vector<8x256xi1>, vector<8x256xf32>
    %190 = arith.mulf %189, %32 : vector<8x256xf32>
    %191 = arith.addf %186, %190 : vector<8x256xf32>
    %cst_58 = arith.constant 0.000000e+00 : f32
    %192 = vector.broadcast %19 : f32 to vector<8x256xf32>
    %193 = vector.broadcast %cst_58 : f32 to vector<8x256xf32>
    %194 = arith.select %78, %192, %193 : vector<8x256xi1>, vector<8x256xf32>
    %195 = arith.mulf %194, %34 : vector<8x256xf32>
    %196 = arith.addf %191, %195 : vector<8x256xf32>
    %cst_59 = arith.constant 0.000000e+00 : f32
    %197 = vector.broadcast %25 : f32 to vector<8x256xf32>
    %198 = vector.broadcast %cst_59 : f32 to vector<8x256xf32>
    %199 = arith.select %90, %197, %198 : vector<8x256xi1>, vector<8x256xf32>
    %200 = arith.mulf %199, %36 : vector<8x256xf32>
    %201 = arith.addf %196, %200 : vector<8x256xf32>
    %cst_60 = arith.constant 0.000000e+00 : f32
    %202 = vector.broadcast %8 : f32 to vector<8x256xf32>
    %203 = vector.broadcast %cst_60 : f32 to vector<8x256xf32>
    %204 = arith.select %56, %202, %203 : vector<8x256xi1>, vector<8x256xf32>
    %205 = arith.mulf %204, %30 : vector<8x256xf32>
    %cst_61 = arith.constant 0.000000e+00 : f32
    %206 = vector.broadcast %14 : f32 to vector<8x256xf32>
    %207 = vector.broadcast %cst_61 : f32 to vector<8x256xf32>
    %208 = arith.select %68, %206, %207 : vector<8x256xi1>, vector<8x256xf32>
    %209 = arith.mulf %208, %32 : vector<8x256xf32>
    %210 = arith.addf %205, %209 : vector<8x256xf32>
    %cst_62 = arith.constant 0.000000e+00 : f32
    %211 = vector.broadcast %20 : f32 to vector<8x256xf32>
    %212 = vector.broadcast %cst_62 : f32 to vector<8x256xf32>
    %213 = arith.select %80, %211, %212 : vector<8x256xi1>, vector<8x256xf32>
    %214 = arith.mulf %213, %34 : vector<8x256xf32>
    %215 = arith.addf %210, %214 : vector<8x256xf32>
    %cst_63 = arith.constant 0.000000e+00 : f32
    %216 = vector.broadcast %26 : f32 to vector<8x256xf32>
    %217 = vector.broadcast %cst_63 : f32 to vector<8x256xf32>
    %218 = arith.select %92, %216, %217 : vector<8x256xi1>, vector<8x256xf32>
    %219 = arith.mulf %218, %36 : vector<8x256xf32>
    %220 = arith.addf %215, %219 : vector<8x256xf32>
    %cst_64 = arith.constant 0.000000e+00 : f32
    %221 = vector.broadcast %9 : f32 to vector<8x256xf32>
    %222 = vector.broadcast %cst_64 : f32 to vector<8x256xf32>
    %223 = arith.select %58, %221, %222 : vector<8x256xi1>, vector<8x256xf32>
    %224 = arith.mulf %223, %30 : vector<8x256xf32>
    %cst_65 = arith.constant 0.000000e+00 : f32
    %225 = vector.broadcast %15 : f32 to vector<8x256xf32>
    %226 = vector.broadcast %cst_65 : f32 to vector<8x256xf32>
    %227 = arith.select %70, %225, %226 : vector<8x256xi1>, vector<8x256xf32>
    %228 = arith.mulf %227, %32 : vector<8x256xf32>
    %229 = arith.addf %224, %228 : vector<8x256xf32>
    %cst_66 = arith.constant 0.000000e+00 : f32
    %230 = vector.broadcast %21 : f32 to vector<8x256xf32>
    %231 = vector.broadcast %cst_66 : f32 to vector<8x256xf32>
    %232 = arith.select %82, %230, %231 : vector<8x256xi1>, vector<8x256xf32>
    %233 = arith.mulf %232, %34 : vector<8x256xf32>
    %234 = arith.addf %229, %233 : vector<8x256xf32>
    %cst_67 = arith.constant 0.000000e+00 : f32
    %235 = vector.broadcast %27 : f32 to vector<8x256xf32>
    %236 = vector.broadcast %cst_67 : f32 to vector<8x256xf32>
    %237 = arith.select %94, %235, %236 : vector<8x256xi1>, vector<8x256xf32>
    %238 = arith.mulf %237, %36 : vector<8x256xf32>
    %239 = arith.addf %234, %238 : vector<8x256xf32>
    %cst_68 = arith.constant 0.000000e+00 : f32
    %240 = vector.broadcast %10 : f32 to vector<8x256xf32>
    %241 = vector.broadcast %cst_68 : f32 to vector<8x256xf32>
    %242 = arith.select %60, %240, %241 : vector<8x256xi1>, vector<8x256xf32>
    %243 = arith.mulf %242, %30 : vector<8x256xf32>
    %cst_69 = arith.constant 0.000000e+00 : f32
    %244 = vector.broadcast %16 : f32 to vector<8x256xf32>
    %245 = vector.broadcast %cst_69 : f32 to vector<8x256xf32>
    %246 = arith.select %72, %244, %245 : vector<8x256xi1>, vector<8x256xf32>
    %247 = arith.mulf %246, %32 : vector<8x256xf32>
    %248 = arith.addf %243, %247 : vector<8x256xf32>
    %cst_70 = arith.constant 0.000000e+00 : f32
    %249 = vector.broadcast %22 : f32 to vector<8x256xf32>
    %250 = vector.broadcast %cst_70 : f32 to vector<8x256xf32>
    %251 = arith.select %84, %249, %250 : vector<8x256xi1>, vector<8x256xf32>
    %252 = arith.mulf %251, %34 : vector<8x256xf32>
    %253 = arith.addf %248, %252 : vector<8x256xf32>
    %cst_71 = arith.constant 0.000000e+00 : f32
    %254 = vector.broadcast %28 : f32 to vector<8x256xf32>
    %255 = vector.broadcast %cst_71 : f32 to vector<8x256xf32>
    %256 = arith.select %96, %254, %255 : vector<8x256xi1>, vector<8x256xf32>
    %257 = arith.mulf %256, %36 : vector<8x256xf32>
    %258 = arith.addf %253, %257 : vector<8x256xf32>
    %259 = arith.select %58, %239, %258 : vector<8x256xi1>, vector<8x256xf32>
    %260 = arith.select %56, %220, %259 : vector<8x256xi1>, vector<8x256xf32>
    %261 = arith.select %54, %201, %260 : vector<8x256xi1>, vector<8x256xf32>
    %262 = arith.select %52, %182, %261 : vector<8x256xi1>, vector<8x256xf32>
    %263 = arith.select %50, %163, %262 : vector<8x256xi1>, vector<8x256xf32>
    %264 = arith.subf %30, %263 : vector<8x256xf32>
    %265 = arith.mulf %264, %264 : vector<8x256xf32>
    %266 = arith.select %70, %239, %258 : vector<8x256xi1>, vector<8x256xf32>
    %267 = arith.select %68, %220, %266 : vector<8x256xi1>, vector<8x256xf32>
    %268 = arith.select %66, %201, %267 : vector<8x256xi1>, vector<8x256xf32>
    %269 = arith.select %64, %182, %268 : vector<8x256xi1>, vector<8x256xf32>
    %270 = arith.select %62, %163, %269 : vector<8x256xi1>, vector<8x256xf32>
    %271 = arith.subf %32, %270 : vector<8x256xf32>
    %272 = arith.mulf %271, %271 : vector<8x256xf32>
    %273 = arith.addf %265, %272 : vector<8x256xf32>
    %274 = arith.select %82, %239, %258 : vector<8x256xi1>, vector<8x256xf32>
    %275 = arith.select %80, %220, %274 : vector<8x256xi1>, vector<8x256xf32>
    %276 = arith.select %78, %201, %275 : vector<8x256xi1>, vector<8x256xf32>
    %277 = arith.select %76, %182, %276 : vector<8x256xi1>, vector<8x256xf32>
    %278 = arith.select %74, %163, %277 : vector<8x256xi1>, vector<8x256xf32>
    %279 = arith.subf %34, %278 : vector<8x256xf32>
    %280 = arith.mulf %279, %279 : vector<8x256xf32>
    %281 = arith.addf %273, %280 : vector<8x256xf32>
    %282 = arith.select %94, %239, %258 : vector<8x256xi1>, vector<8x256xf32>
    %283 = arith.select %92, %220, %282 : vector<8x256xi1>, vector<8x256xf32>
    %284 = arith.select %90, %201, %283 : vector<8x256xi1>, vector<8x256xf32>
    %285 = arith.select %88, %182, %284 : vector<8x256xi1>, vector<8x256xf32>
    %286 = arith.select %86, %163, %285 : vector<8x256xi1>, vector<8x256xf32>
    %287 = arith.subf %36, %286 : vector<8x256xf32>
    %288 = arith.mulf %287, %287 : vector<8x256xf32>
    %289 = arith.addf %281, %288 : vector<8x256xf32>
    %c0_72 = arith.constant 0 : index
    %c0_73 = arith.constant 0 : index
    %290 = vector.load %arg8[%c0_72, %c0_73] : memref<8x256xf32, #tpu.memory_space<vmem>>, vector<8x256xf32>
    %291 = arith.addf %290, %289 : vector<8x256xf32>
    %c0_74 = arith.constant 0 : index
    %c0_75 = arith.constant 0 : index
    %292 = vector.load %arg8[%c0_74, %c0_75] : memref<8x256xf32, #tpu.memory_space<vmem>>, vector<8x256xf32>
    tpu.vector_store %arg8[%c0_74, %c0_75], %291 {strides = array<i32>} : memref<8x256xf32, #tpu.memory_space<vmem>>, vector<8x256xf32>,
    %293 = arith.mulf %163, %163 : vector<8x256xf32>
    %cst_76 = arith.constant dense<0.000000e+00> : vector<256xf32>
    %294 = vector.multi_reduction <add>, %293, %cst_76 [0] : vector<8x256xf32> to vector<256xf32>
    %295 = vector.shape_cast %294 : vector<256xf32> to vector<1x256xf32>
    %296 = arith.mulf %182, %182 : vector<8x256xf32>
    %cst_77 = arith.constant dense<0.000000e+00> : vector<256xf32>
    %297 = vector.multi_reduction <add>, %296, %cst_77 [0] : vector<8x256xf32> to vector<256xf32>
    %298 = vector.shape_cast %297 : vector<256xf32> to vector<1x256xf32>
    %299 = arith.mulf %201, %201 : vector<8x256xf32>
    %cst_78 = arith.constant dense<0.000000e+00> : vector<256xf32>
    %300 = vector.multi_reduction <add>, %299, %cst_78 [0] : vector<8x256xf32> to vector<256xf32>
    %301 = vector.shape_cast %300 : vector<256xf32> to vector<1x256xf32>
    %302 = arith.mulf %220, %220 : vector<8x256xf32>
    %cst_79 = arith.constant dense<0.000000e+00> : vector<256xf32>
    %303 = vector.multi_reduction <add>, %302, %cst_79 [0] : vector<8x256xf32> to vector<256xf32>
    %304 = vector.shape_cast %303 : vector<256xf32> to vector<1x256xf32>
    %305 = arith.mulf %239, %239 : vector<8x256xf32>
    %cst_80 = arith.constant dense<0.000000e+00> : vector<256xf32>
    %306 = vector.multi_reduction <add>, %305, %cst_80 [0] : vector<8x256xf32> to vector<256xf32>
    %307 = vector.shape_cast %306 : vector<256xf32> to vector<1x256xf32>
    %308 = arith.mulf %258, %258 : vector<8x256xf32>
    %cst_81 = arith.constant dense<0.000000e+00> : vector<256xf32>
    %309 = vector.multi_reduction <add>, %308, %cst_81 [0] : vector<8x256xf32> to vector<256xf32>
    %310 = vector.shape_cast %309 : vector<256xf32> to vector<1x256xf32>
    %311 = arith.mulf %163, %182 : vector<8x256xf32>
    %cst_82 = arith.constant dense<0.000000e+00> : vector<256xf32>
    %312 = vector.multi_reduction <add>, %311, %cst_82 [0] : vector<8x256xf32> to vector<256xf32>
    %313 = vector.shape_cast %312 : vector<256xf32> to vector<1x256xf32>
    %314 = arith.mulf %313, %313 : vector<1x256xf32>
    %315 = arith.mulf %163, %201 : vector<8x256xf32>
    %cst_83 = arith.constant dense<0.000000e+00> : vector<256xf32>
    %316 = vector.multi_reduction <add>, %315, %cst_83 [0] : vector<8x256xf32> to vector<256xf32>
    %317 = vector.shape_cast %316 : vector<256xf32> to vector<1x256xf32>
    %318 = arith.mulf %317, %317 : vector<1x256xf32>
    %319 = arith.addf %314, %318 : vector<1x256xf32>
    %320 = arith.mulf %163, %220 : vector<8x256xf32>
    %cst_84 = arith.constant dense<0.000000e+00> : vector<256xf32>
    %321 = vector.multi_reduction <add>, %320, %cst_84 [0] : vector<8x256xf32> to vector<256xf32>
    %322 = vector.shape_cast %321 : vector<256xf32> to vector<1x256xf32>
    %323 = arith.mulf %322, %322 : vector<1x256xf32>
    %324 = arith.addf %319, %323 : vector<1x256xf32>
    %325 = arith.mulf %163, %239 : vector<8x256xf32>
    %cst_85 = arith.constant dense<0.000000e+00> : vector<256xf32>
    %326 = vector.multi_reduction <add>, %325, %cst_85 [0] : vector<8x256xf32> to vector<256xf32>
    %327 = vector.shape_cast %326 : vector<256xf32> to vector<1x256xf32>
    %328 = arith.mulf %327, %327 : vector<1x256xf32>
    %329 = arith.addf %324, %328 : vector<1x256xf32>
    %330 = arith.mulf %163, %258 : vector<8x256xf32>
    %cst_86 = arith.constant dense<0.000000e+00> : vector<256xf32>
    %331 = vector.multi_reduction <add>, %330, %cst_86 [0] : vector<8x256xf32> to vector<256xf32>
    %332 = vector.shape_cast %331 : vector<256xf32> to vector<1x256xf32>
    %333 = arith.mulf %332, %332 : vector<1x256xf32>
    %334 = arith.addf %329, %333 : vector<1x256xf32>
    %335 = arith.mulf %182, %201 : vector<8x256xf32>
    %cst_87 = arith.constant dense<0.000000e+00> : vector<256xf32>
    %336 = vector.multi_reduction <add>, %335, %cst_87 [0] : vector<8x256xf32> to vector<256xf32>
    %337 = vector.shape_cast %336 : vector<256xf32> to vector<1x256xf32>
    %338 = arith.mulf %337, %337 : vector<1x256xf32>
    %339 = arith.addf %334, %338 : vector<1x256xf32>
    %340 = arith.mulf %182, %220 : vector<8x256xf32>
    %cst_88 = arith.constant dense<0.000000e+00> : vector<256xf32>
    %341 = vector.multi_reduction <add>, %340, %cst_88 [0] : vector<8x256xf32> to vector<256xf32>
    %342 = vector.shape_cast %341 : vector<256xf32> to vector<1x256xf32>
    %343 = arith.mulf %342, %342 : vector<1x256xf32>
    %344 = arith.addf %339, %343 : vector<1x256xf32>
    %345 = arith.mulf %182, %239 : vector<8x256xf32>
    %cst_89 = arith.constant dense<0.000000e+00> : vector<256xf32>
    %346 = vector.multi_reduction <add>, %345, %cst_89 [0] : vector<8x256xf32> to vector<256xf32>
    %347 = vector.shape_cast %346 : vector<256xf32> to vector<1x256xf32>
    %348 = arith.mulf %347, %347 : vector<1x256xf32>
    %349 = arith.addf %344, %348 : vector<1x256xf32>
    %350 = arith.mulf %182, %258 : vector<8x256xf32>
    %cst_90 = arith.constant dense<0.000000e+00> : vector<256xf32>
    %351 = vector.multi_reduction <add>, %350, %cst_90 [0] : vector<8x256xf32> to vector<256xf32>
    %352 = vector.shape_cast %351 : vector<256xf32> to vector<1x256xf32>
    %353 = arith.mulf %352, %352 : vector<1x256xf32>
    %354 = arith.addf %349, %353 : vector<1x256xf32>
    %355 = arith.mulf %201, %220 : vector<8x256xf32>
    %cst_91 = arith.constant dense<0.000000e+00> : vector<256xf32>
    %356 = vector.multi_reduction <add>, %355, %cst_91 [0] : vector<8x256xf32> to vector<256xf32>
    %357 = vector.shape_cast %356 : vector<256xf32> to vector<1x256xf32>
    %358 = arith.mulf %357, %357 : vector<1x256xf32>
    %359 = arith.addf %354, %358 : vector<1x256xf32>
    %360 = arith.mulf %201, %239 : vector<8x256xf32>
    %cst_92 = arith.constant dense<0.000000e+00> : vector<256xf32>
    %361 = vector.multi_reduction <add>, %360, %cst_92 [0] : vector<8x256xf32> to vector<256xf32>
    %362 = vector.shape_cast %361 : vector<256xf32> to vector<1x256xf32>
    %363 = arith.mulf %362, %362 : vector<1x256xf32>
    %364 = arith.addf %359, %363 : vector<1x256xf32>
    %365 = arith.mulf %201, %258 : vector<8x256xf32>
    %cst_93 = arith.constant dense<0.000000e+00> : vector<256xf32>
    %366 = vector.multi_reduction <add>, %365, %cst_93 [0] : vector<8x256xf32> to vector<256xf32>
    %367 = vector.shape_cast %366 : vector<256xf32> to vector<1x256xf32>
    %368 = arith.mulf %367, %367 : vector<1x256xf32>
    %369 = arith.addf %364, %368 : vector<1x256xf32>
    %370 = arith.mulf %220, %239 : vector<8x256xf32>
    %cst_94 = arith.constant dense<0.000000e+00> : vector<256xf32>
    %371 = vector.multi_reduction <add>, %370, %cst_94 [0] : vector<8x256xf32> to vector<256xf32>
    %372 = vector.shape_cast %371 : vector<256xf32> to vector<1x256xf32>
    %373 = arith.mulf %372, %372 : vector<1x256xf32>
    %374 = arith.addf %369, %373 : vector<1x256xf32>
    %375 = arith.mulf %220, %258 : vector<8x256xf32>
    %cst_95 = arith.constant dense<0.000000e+00> : vector<256xf32>
    %376 = vector.multi_reduction <add>, %375, %cst_95 [0] : vector<8x256xf32> to vector<256xf32>
    %377 = vector.shape_cast %376 : vector<256xf32> to vector<1x256xf32>
    %378 = arith.mulf %377, %377 : vector<1x256xf32>
    %379 = arith.addf %374, %378 : vector<1x256xf32>
    %380 = arith.mulf %239, %258 : vector<8x256xf32>
    %cst_96 = arith.constant dense<0.000000e+00> : vector<256xf32>
    %381 = vector.multi_reduction <add>, %380, %cst_96 [0] : vector<8x256xf32> to vector<256xf32>
    %382 = vector.shape_cast %381 : vector<256xf32> to vector<1x256xf32>
    %383 = arith.mulf %382, %382 : vector<1x256xf32>
    %384 = arith.addf %379, %383 : vector<1x256xf32>
    %c0_97 = arith.constant 0 : index
    %c0_98 = arith.constant 0 : index
    %385 = vector.load %arg9[%c0_97, %c0_98] : memref<1x256xf32, #tpu.memory_space<vmem>>, vector<1x256xf32>
    %cst_99 = arith.constant 2.000000e+00 : f32
    %386 = vector.broadcast %cst_99 : f32 to vector<1x256xf32>
    %387 = arith.mulf %386, %384 : vector<1x256xf32>
    %388 = arith.addf %385, %387 : vector<1x256xf32>
    %c0_100 = arith.constant 0 : index
    %c0_101 = arith.constant 0 : index
    %389 = vector.load %arg9[%c0_100, %c0_101] : memref<1x256xf32, #tpu.memory_space<vmem>>, vector<1x256xf32>
    tpu.vector_store %arg9[%c0_100, %c0_101], %388 {strides = array<i32>} : memref<1x256xf32, #tpu.memory_space<vmem>>, vector<1x256xf32>,
    %390 = arith.mulf %163, %30 : vector<8x256xf32>
    %cst_102 = arith.constant dense<0.000000e+00> : vector<256xf32>
    %391 = vector.multi_reduction <add>, %390, %cst_102 [0] : vector<8x256xf32> to vector<256xf32>
    %392 = vector.shape_cast %391 : vector<256xf32> to vector<1x256xf32>
    %393 = arith.addf %392, %295 : vector<1x256xf32>
    %394 = arith.select %98, %295, %393 : vector<1x256xi1>, vector<1x256xf32>
    %395 = arith.mulf %182, %30 : vector<8x256xf32>
    %cst_103 = arith.constant dense<0.000000e+00> : vector<256xf32>
    %396 = vector.multi_reduction <add>, %395, %cst_103 [0] : vector<8x256xf32> to vector<256xf32>
    %397 = vector.shape_cast %396 : vector<256xf32> to vector<1x256xf32>
    %398 = arith.addf %397, %298 : vector<1x256xf32>
    %399 = arith.select %100, %298, %398 : vector<1x256xi1>, vector<1x256xf32>
    %400 = arith.mulf %201, %30 : vector<8x256xf32>
    %cst_104 = arith.constant dense<0.000000e+00> : vector<256xf32>
    %401 = vector.multi_reduction <add>, %400, %cst_104 [0] : vector<8x256xf32> to vector<256xf32>
    %402 = vector.shape_cast %401 : vector<256xf32> to vector<1x256xf32>
    %403 = arith.addf %402, %301 : vector<1x256xf32>
    %404 = arith.select %102, %301, %403 : vector<1x256xi1>, vector<1x256xf32>
    %405 = arith.mulf %220, %30 : vector<8x256xf32>
    %cst_105 = arith.constant dense<0.000000e+00> : vector<256xf32>
    %406 = vector.multi_reduction <add>, %405, %cst_105 [0] : vector<8x256xf32> to vector<256xf32>
    %407 = vector.shape_cast %406 : vector<256xf32> to vector<1x256xf32>
    %408 = arith.addf %407, %304 : vector<1x256xf32>
    %409 = arith.select %104, %304, %408 : vector<1x256xi1>, vector<1x256xf32>
    %410 = arith.mulf %239, %30 : vector<8x256xf32>
    %cst_106 = arith.constant dense<0.000000e+00> : vector<256xf32>
    %411 = vector.multi_reduction <add>, %410, %cst_106 [0] : vector<8x256xf32> to vector<256xf32>
    %412 = vector.shape_cast %411 : vector<256xf32> to vector<1x256xf32>
    %413 = arith.addf %412, %307 : vector<1x256xf32>
    %414 = arith.select %106, %307, %413 : vector<1x256xi1>, vector<1x256xf32>
    %415 = arith.mulf %258, %30 : vector<8x256xf32>
    %cst_107 = arith.constant dense<0.000000e+00> : vector<256xf32>
    %416 = vector.multi_reduction <add>, %415, %cst_107 [0] : vector<8x256xf32> to vector<256xf32>
    %417 = vector.shape_cast %416 : vector<256xf32> to vector<1x256xf32>
    %418 = arith.addf %417, %310 : vector<1x256xf32>
    %419 = arith.select %108, %310, %418 : vector<1x256xi1>, vector<1x256xf32>
    %420 = arith.maximumf %394, %399 : vector<1x256xf32>
    %421 = arith.maximumf %420, %404 : vector<1x256xf32>
    %422 = arith.maximumf %421, %409 : vector<1x256xf32>
    %423 = arith.maximumf %422, %414 : vector<1x256xf32>
    %424 = arith.maximumf %423, %419 : vector<1x256xf32>
    %425 = arith.subf %394, %424 : vector<1x256xf32>
    %426 = math.exp %425 : vector<1x256xf32>
    %427 = arith.subf %399, %424 : vector<1x256xf32>
    %428 = math.exp %427 : vector<1x256xf32>
    %429 = arith.subf %404, %424 : vector<1x256xf32>
    %430 = math.exp %429 : vector<1x256xf32>
    %431 = arith.subf %409, %424 : vector<1x256xf32>
    %432 = math.exp %431 : vector<1x256xf32>
    %433 = arith.subf %414, %424 : vector<1x256xf32>
    %434 = math.exp %433 : vector<1x256xf32>
    %435 = arith.subf %419, %424 : vector<1x256xf32>
    %436 = math.exp %435 : vector<1x256xf32>
    %437 = arith.addf %426, %428 : vector<1x256xf32>
    %438 = arith.addf %437, %430 : vector<1x256xf32>
    %439 = arith.addf %438, %432 : vector<1x256xf32>
    %440 = arith.addf %439, %434 : vector<1x256xf32>
    %441 = arith.addf %440, %436 : vector<1x256xf32>
    %442 = tpu.reciprocal %441 : vector<1x256xf32> -> vector<1x256xf32>
    %443 = arith.mulf %426, %442 : vector<1x256xf32>
    %cst_108 = arith.constant 0.166666672 : f32
    %444 = vector.broadcast %cst_108 : f32 to vector<1x256xf32>
    %445 = arith.subf %443, %444 : vector<1x256xf32>
    %cst_109 = arith.constant 0.000000e+00 : f32
    %446 = vector.broadcast %cst_109 : f32 to vector<1x256xf32>
    %447 = arith.select %98, %446, %445 : vector<1x256xi1>, vector<1x256xf32>
    %448 = arith.mulf %447, %447 : vector<1x256xf32>
    %449 = arith.mulf %428, %442 : vector<1x256xf32>
    %cst_110 = arith.constant 0.166666672 : f32
    %450 = vector.broadcast %cst_110 : f32 to vector<1x256xf32>
    %451 = arith.subf %449, %450 : vector<1x256xf32>
    %cst_111 = arith.constant 0.000000e+00 : f32
    %452 = vector.broadcast %cst_111 : f32 to vector<1x256xf32>
    %453 = arith.select %100, %452, %451 : vector<1x256xi1>, vector<1x256xf32>
    %454 = arith.mulf %453, %453 : vector<1x256xf32>
    %455 = arith.addf %448, %454 : vector<1x256xf32>
    %456 = arith.mulf %430, %442 : vector<1x256xf32>
    %cst_112 = arith.constant 0.166666672 : f32
    %457 = vector.broadcast %cst_112 : f32 to vector<1x256xf32>
    %458 = arith.subf %456, %457 : vector<1x256xf32>
    %cst_113 = arith.constant 0.000000e+00 : f32
    %459 = vector.broadcast %cst_113 : f32 to vector<1x256xf32>
    %460 = arith.select %102, %459, %458 : vector<1x256xi1>, vector<1x256xf32>
    %461 = arith.mulf %460, %460 : vector<1x256xf32>
    %462 = arith.addf %455, %461 : vector<1x256xf32>
    %463 = arith.mulf %432, %442 : vector<1x256xf32>
    %cst_114 = arith.constant 0.166666672 : f32
    %464 = vector.broadcast %cst_114 : f32 to vector<1x256xf32>
    %465 = arith.subf %463, %464 : vector<1x256xf32>
    %cst_115 = arith.constant 0.000000e+00 : f32
    %466 = vector.broadcast %cst_115 : f32 to vector<1x256xf32>
    %467 = arith.select %104, %466, %465 : vector<1x256xi1>, vector<1x256xf32>
    %468 = arith.mulf %467, %467 : vector<1x256xf32>
    %469 = arith.addf %462, %468 : vector<1x256xf32>
    %470 = arith.mulf %434, %442 : vector<1x256xf32>
    %cst_116 = arith.constant 0.166666672 : f32
    %471 = vector.broadcast %cst_116 : f32 to vector<1x256xf32>
    %472 = arith.subf %470, %471 : vector<1x256xf32>
    %cst_117 = arith.constant 0.000000e+00 : f32
    %473 = vector.broadcast %cst_117 : f32 to vector<1x256xf32>
    %474 = arith.select %106, %473, %472 : vector<1x256xi1>, vector<1x256xf32>
    %475 = arith.mulf %474, %474 : vector<1x256xf32>
    %476 = arith.addf %469, %475 : vector<1x256xf32>
    %477 = arith.mulf %436, %442 : vector<1x256xf32>
    %cst_118 = arith.constant 0.166666672 : f32
    %478 = vector.broadcast %cst_118 : f32 to vector<1x256xf32>
    %479 = arith.subf %477, %478 : vector<1x256xf32>
    %cst_119 = arith.constant 0.000000e+00 : f32
    %480 = vector.broadcast %cst_119 : f32 to vector<1x256xf32>
    %481 = arith.select %108, %480, %479 : vector<1x256xi1>, vector<1x256xf32>
    %482 = arith.mulf %481, %481 : vector<1x256xf32>
    %483 = arith.addf %476, %482 : vector<1x256xf32>
    %484 = arith.mulf %163, %32 : vector<8x256xf32>
    %cst_120 = arith.constant dense<0.000000e+00> : vector<256xf32>
    %485 = vector.multi_reduction <add>, %484, %cst_120 [0] : vector<8x256xf32> to vector<256xf32>
    %486 = vector.shape_cast %485 : vector<256xf32> to vector<1x256xf32>
    %487 = arith.addf %486, %295 : vector<1x256xf32>
    %488 = arith.select %110, %295, %487 : vector<1x256xi1>, vector<1x256xf32>
    %489 = arith.mulf %182, %32 : vector<8x256xf32>
    %cst_121 = arith.constant dense<0.000000e+00> : vector<256xf32>
    %490 = vector.multi_reduction <add>, %489, %cst_121 [0] : vector<8x256xf32> to vector<256xf32>
    %491 = vector.shape_cast %490 : vector<256xf32> to vector<1x256xf32>
    %492 = arith.addf %491, %298 : vector<1x256xf32>
    %493 = arith.select %112, %298, %492 : vector<1x256xi1>, vector<1x256xf32>
    %494 = arith.mulf %201, %32 : vector<8x256xf32>
    %cst_122 = arith.constant dense<0.000000e+00> : vector<256xf32>
    %495 = vector.multi_reduction <add>, %494, %cst_122 [0] : vector<8x256xf32> to vector<256xf32>
    %496 = vector.shape_cast %495 : vector<256xf32> to vector<1x256xf32>
    %497 = arith.addf %496, %301 : vector<1x256xf32>
    %498 = arith.select %114, %301, %497 : vector<1x256xi1>, vector<1x256xf32>
    %499 = arith.mulf %220, %32 : vector<8x256xf32>
    %cst_123 = arith.constant dense<0.000000e+00> : vector<256xf32>
    %500 = vector.multi_reduction <add>, %499, %cst_123 [0] : vector<8x256xf32> to vector<256xf32>
    %501 = vector.shape_cast %500 : vector<256xf32> to vector<1x256xf32>
    %502 = arith.addf %501, %304 : vector<1x256xf32>
    %503 = arith.select %116, %304, %502 : vector<1x256xi1>, vector<1x256xf32>
    %504 = arith.mulf %239, %32 : vector<8x256xf32>
    %cst_124 = arith.constant dense<0.000000e+00> : vector<256xf32>
    %505 = vector.multi_reduction <add>, %504, %cst_124 [0] : vector<8x256xf32> to vector<256xf32>
    %506 = vector.shape_cast %505 : vector<256xf32> to vector<1x256xf32>
    %507 = arith.addf %506, %307 : vector<1x256xf32>
    %508 = arith.select %118, %307, %507 : vector<1x256xi1>, vector<1x256xf32>
    %509 = arith.mulf %258, %32 : vector<8x256xf32>
    %cst_125 = arith.constant dense<0.000000e+00> : vector<256xf32>
    %510 = vector.multi_reduction <add>, %509, %cst_125 [0] : vector<8x256xf32> to vector<256xf32>
    %511 = vector.shape_cast %510 : vector<256xf32> to vector<1x256xf32>
    %512 = arith.addf %511, %310 : vector<1x256xf32>
    %513 = arith.select %120, %310, %512 : vector<1x256xi1>, vector<1x256xf32>
    %514 = arith.maximumf %488, %493 : vector<1x256xf32>
    %515 = arith.maximumf %514, %498 : vector<1x256xf32>
    %516 = arith.maximumf %515, %503 : vector<1x256xf32>
    %517 = arith.maximumf %516, %508 : vector<1x256xf32>
    %518 = arith.maximumf %517, %513 : vector<1x256xf32>
    %519 = arith.subf %488, %518 : vector<1x256xf32>
    %520 = math.exp %519 : vector<1x256xf32>
    %521 = arith.subf %493, %518 : vector<1x256xf32>
    %522 = math.exp %521 : vector<1x256xf32>
    %523 = arith.subf %498, %518 : vector<1x256xf32>
    %524 = math.exp %523 : vector<1x256xf32>
    %525 = arith.subf %503, %518 : vector<1x256xf32>
    %526 = math.exp %525 : vector<1x256xf32>
    %527 = arith.subf %508, %518 : vector<1x256xf32>
    %528 = math.exp %527 : vector<1x256xf32>
    %529 = arith.subf %513, %518 : vector<1x256xf32>
    %530 = math.exp %529 : vector<1x256xf32>
    %531 = arith.addf %520, %522 : vector<1x256xf32>
    %532 = arith.addf %531, %524 : vector<1x256xf32>
    %533 = arith.addf %532, %526 : vector<1x256xf32>
    %534 = arith.addf %533, %528 : vector<1x256xf32>
    %535 = arith.addf %534, %530 : vector<1x256xf32>
    %536 = tpu.reciprocal %535 : vector<1x256xf32> -> vector<1x256xf32>
    %537 = arith.mulf %520, %536 : vector<1x256xf32>
    %cst_126 = arith.constant 0.166666672 : f32
    %538 = vector.broadcast %cst_126 : f32 to vector<1x256xf32>
    %539 = arith.subf %537, %538 : vector<1x256xf32>
    %cst_127 = arith.constant 0.000000e+00 : f32
    %540 = vector.broadcast %cst_127 : f32 to vector<1x256xf32>
    %541 = arith.select %110, %540, %539 : vector<1x256xi1>, vector<1x256xf32>
    %542 = arith.mulf %541, %541 : vector<1x256xf32>
    %543 = arith.addf %483, %542 : vector<1x256xf32>
    %544 = arith.mulf %522, %536 : vector<1x256xf32>
    %cst_128 = arith.constant 0.166666672 : f32
    %545 = vector.broadcast %cst_128 : f32 to vector<1x256xf32>
    %546 = arith.subf %544, %545 : vector<1x256xf32>
    %cst_129 = arith.constant 0.000000e+00 : f32
    %547 = vector.broadcast %cst_129 : f32 to vector<1x256xf32>
    %548 = arith.select %112, %547, %546 : vector<1x256xi1>, vector<1x256xf32>
    %549 = arith.mulf %548, %548 : vector<1x256xf32>
    %550 = arith.addf %543, %549 : vector<1x256xf32>
    %551 = arith.mulf %524, %536 : vector<1x256xf32>
    %cst_130 = arith.constant 0.166666672 : f32
    %552 = vector.broadcast %cst_130 : f32 to vector<1x256xf32>
    %553 = arith.subf %551, %552 : vector<1x256xf32>
    %cst_131 = arith.constant 0.000000e+00 : f32
    %554 = vector.broadcast %cst_131 : f32 to vector<1x256xf32>
    %555 = arith.select %114, %554, %553 : vector<1x256xi1>, vector<1x256xf32>
    %556 = arith.mulf %555, %555 : vector<1x256xf32>
    %557 = arith.addf %550, %556 : vector<1x256xf32>
    %558 = arith.mulf %526, %536 : vector<1x256xf32>
    %cst_132 = arith.constant 0.166666672 : f32
    %559 = vector.broadcast %cst_132 : f32 to vector<1x256xf32>
    %560 = arith.subf %558, %559 : vector<1x256xf32>
    %cst_133 = arith.constant 0.000000e+00 : f32
    %561 = vector.broadcast %cst_133 : f32 to vector<1x256xf32>
    %562 = arith.select %116, %561, %560 : vector<1x256xi1>, vector<1x256xf32>
    %563 = arith.mulf %562, %562 : vector<1x256xf32>
    %564 = arith.addf %557, %563 : vector<1x256xf32>
    %565 = arith.mulf %528, %536 : vector<1x256xf32>
    %cst_134 = arith.constant 0.166666672 : f32
    %566 = vector.broadcast %cst_134 : f32 to vector<1x256xf32>
    %567 = arith.subf %565, %566 : vector<1x256xf32>
    %cst_135 = arith.constant 0.000000e+00 : f32
    %568 = vector.broadcast %cst_135 : f32 to vector<1x256xf32>
    %569 = arith.select %118, %568, %567 : vector<1x256xi1>, vector<1x256xf32>
    %570 = arith.mulf %569, %569 : vector<1x256xf32>
    %571 = arith.addf %564, %570 : vector<1x256xf32>
    %572 = arith.mulf %530, %536 : vector<1x256xf32>
    %cst_136 = arith.constant 0.166666672 : f32
    %573 = vector.broadcast %cst_136 : f32 to vector<1x256xf32>
    %574 = arith.subf %572, %573 : vector<1x256xf32>
    %cst_137 = arith.constant 0.000000e+00 : f32
    %575 = vector.broadcast %cst_137 : f32 to vector<1x256xf32>
    %576 = arith.select %120, %575, %574 : vector<1x256xi1>, vector<1x256xf32>
    %577 = arith.mulf %576, %576 : vector<1x256xf32>
    %578 = arith.addf %571, %577 : vector<1x256xf32>
    %579 = arith.mulf %163, %34 : vector<8x256xf32>
    %cst_138 = arith.constant dense<0.000000e+00> : vector<256xf32>
    %580 = vector.multi_reduction <add>, %579, %cst_138 [0] : vector<8x256xf32> to vector<256xf32>
    %581 = vector.shape_cast %580 : vector<256xf32> to vector<1x256xf32>
    %582 = arith.addf %581, %295 : vector<1x256xf32>
    %583 = arith.select %122, %295, %582 : vector<1x256xi1>, vector<1x256xf32>
    %584 = arith.mulf %182, %34 : vector<8x256xf32>
    %cst_139 = arith.constant dense<0.000000e+00> : vector<256xf32>
    %585 = vector.multi_reduction <add>, %584, %cst_139 [0] : vector<8x256xf32> to vector<256xf32>
    %586 = vector.shape_cast %585 : vector<256xf32> to vector<1x256xf32>
    %587 = arith.addf %586, %298 : vector<1x256xf32>
    %588 = arith.select %124, %298, %587 : vector<1x256xi1>, vector<1x256xf32>
    %589 = arith.mulf %201, %34 : vector<8x256xf32>
    %cst_140 = arith.constant dense<0.000000e+00> : vector<256xf32>
    %590 = vector.multi_reduction <add>, %589, %cst_140 [0] : vector<8x256xf32> to vector<256xf32>
    %591 = vector.shape_cast %590 : vector<256xf32> to vector<1x256xf32>
    %592 = arith.addf %591, %301 : vector<1x256xf32>
    %593 = arith.select %126, %301, %592 : vector<1x256xi1>, vector<1x256xf32>
    %594 = arith.mulf %220, %34 : vector<8x256xf32>
    %cst_141 = arith.constant dense<0.000000e+00> : vector<256xf32>
    %595 = vector.multi_reduction <add>, %594, %cst_141 [0] : vector<8x256xf32> to vector<256xf32>
    %596 = vector.shape_cast %595 : vector<256xf32> to vector<1x256xf32>
    %597 = arith.addf %596, %304 : vector<1x256xf32>
    %598 = arith.select %128, %304, %597 : vector<1x256xi1>, vector<1x256xf32>
    %599 = arith.mulf %239, %34 : vector<8x256xf32>
    %cst_142 = arith.constant dense<0.000000e+00> : vector<256xf32>
    %600 = vector.multi_reduction <add>, %599, %cst_142 [0] : vector<8x256xf32> to vector<256xf32>
    %601 = vector.shape_cast %600 : vector<256xf32> to vector<1x256xf32>
    %602 = arith.addf %601, %307 : vector<1x256xf32>
    %603 = arith.select %130, %307, %602 : vector<1x256xi1>, vector<1x256xf32>
    %604 = arith.mulf %258, %34 : vector<8x256xf32>
    %cst_143 = arith.constant dense<0.000000e+00> : vector<256xf32>
    %605 = vector.multi_reduction <add>, %604, %cst_143 [0] : vector<8x256xf32> to vector<256xf32>
    %606 = vector.shape_cast %605 : vector<256xf32> to vector<1x256xf32>
    %607 = arith.addf %606, %310 : vector<1x256xf32>
    %608 = arith.select %132, %310, %607 : vector<1x256xi1>, vector<1x256xf32>
    %609 = arith.maximumf %583, %588 : vector<1x256xf32>
    %610 = arith.maximumf %609, %593 : vector<1x256xf32>
    %611 = arith.maximumf %610, %598 : vector<1x256xf32>
    %612 = arith.maximumf %611, %603 : vector<1x256xf32>
    %613 = arith.maximumf %612, %608 : vector<1x256xf32>
    %614 = arith.subf %583, %613 : vector<1x256xf32>
    %615 = math.exp %614 : vector<1x256xf32>
    %616 = arith.subf %588, %613 : vector<1x256xf32>
    %617 = math.exp %616 : vector<1x256xf32>
    %618 = arith.subf %593, %613 : vector<1x256xf32>
    %619 = math.exp %618 : vector<1x256xf32>
    %620 = arith.subf %598, %613 : vector<1x256xf32>
    %621 = math.exp %620 : vector<1x256xf32>
    %622 = arith.subf %603, %613 : vector<1x256xf32>
    %623 = math.exp %622 : vector<1x256xf32>
    %624 = arith.subf %608, %613 : vector<1x256xf32>
    %625 = math.exp %624 : vector<1x256xf32>
    %626 = arith.addf %615, %617 : vector<1x256xf32>
    %627 = arith.addf %626, %619 : vector<1x256xf32>
    %628 = arith.addf %627, %621 : vector<1x256xf32>
    %629 = arith.addf %628, %623 : vector<1x256xf32>
    %630 = arith.addf %629, %625 : vector<1x256xf32>
    %631 = tpu.reciprocal %630 : vector<1x256xf32> -> vector<1x256xf32>
    %632 = arith.mulf %615, %631 : vector<1x256xf32>
    %cst_144 = arith.constant 0.166666672 : f32
    %633 = vector.broadcast %cst_144 : f32 to vector<1x256xf32>
    %634 = arith.subf %632, %633 : vector<1x256xf32>
    %cst_145 = arith.constant 0.000000e+00 : f32
    %635 = vector.broadcast %cst_145 : f32 to vector<1x256xf32>
    %636 = arith.select %122, %635, %634 : vector<1x256xi1>, vector<1x256xf32>
    %637 = arith.mulf %636, %636 : vector<1x256xf32>
    %638 = arith.addf %578, %637 : vector<1x256xf32>
    %639 = arith.mulf %617, %631 : vector<1x256xf32>
    %cst_146 = arith.constant 0.166666672 : f32
    %640 = vector.broadcast %cst_146 : f32 to vector<1x256xf32>
    %641 = arith.subf %639, %640 : vector<1x256xf32>
    %cst_147 = arith.constant 0.000000e+00 : f32
    %642 = vector.broadcast %cst_147 : f32 to vector<1x256xf32>
    %643 = arith.select %124, %642, %641 : vector<1x256xi1>, vector<1x256xf32>
    %644 = arith.mulf %643, %643 : vector<1x256xf32>
    %645 = arith.addf %638, %644 : vector<1x256xf32>
    %646 = arith.mulf %619, %631 : vector<1x256xf32>
    %cst_148 = arith.constant 0.166666672 : f32
    %647 = vector.broadcast %cst_148 : f32 to vector<1x256xf32>
    %648 = arith.subf %646, %647 : vector<1x256xf32>
    %cst_149 = arith.constant 0.000000e+00 : f32
    %649 = vector.broadcast %cst_149 : f32 to vector<1x256xf32>
    %650 = arith.select %126, %649, %648 : vector<1x256xi1>, vector<1x256xf32>
    %651 = arith.mulf %650, %650 : vector<1x256xf32>
    %652 = arith.addf %645, %651 : vector<1x256xf32>
    %653 = arith.mulf %621, %631 : vector<1x256xf32>
    %cst_150 = arith.constant 0.166666672 : f32
    %654 = vector.broadcast %cst_150 : f32 to vector<1x256xf32>
    %655 = arith.subf %653, %654 : vector<1x256xf32>
    %cst_151 = arith.constant 0.000000e+00 : f32
    %656 = vector.broadcast %cst_151 : f32 to vector<1x256xf32>
    %657 = arith.select %128, %656, %655 : vector<1x256xi1>, vector<1x256xf32>
    %658 = arith.mulf %657, %657 : vector<1x256xf32>
    %659 = arith.addf %652, %658 : vector<1x256xf32>
    %660 = arith.mulf %623, %631 : vector<1x256xf32>
    %cst_152 = arith.constant 0.166666672 : f32
    %661 = vector.broadcast %cst_152 : f32 to vector<1x256xf32>
    %662 = arith.subf %660, %661 : vector<1x256xf32>
    %cst_153 = arith.constant 0.000000e+00 : f32
    %663 = vector.broadcast %cst_153 : f32 to vector<1x256xf32>
    %664 = arith.select %130, %663, %662 : vector<1x256xi1>, vector<1x256xf32>
    %665 = arith.mulf %664, %664 : vector<1x256xf32>
    %666 = arith.addf %659, %665 : vector<1x256xf32>
    %667 = arith.mulf %625, %631 : vector<1x256xf32>
    %cst_154 = arith.constant 0.166666672 : f32
    %668 = vector.broadcast %cst_154 : f32 to vector<1x256xf32>
    %669 = arith.subf %667, %668 : vector<1x256xf32>
    %cst_155 = arith.constant 0.000000e+00 : f32
    %670 = vector.broadcast %cst_155 : f32 to vector<1x256xf32>
    %671 = arith.select %132, %670, %669 : vector<1x256xi1>, vector<1x256xf32>
    %672 = arith.mulf %671, %671 : vector<1x256xf32>
    %673 = arith.addf %666, %672 : vector<1x256xf32>
    %674 = arith.mulf %163, %36 : vector<8x256xf32>
    %cst_156 = arith.constant dense<0.000000e+00> : vector<256xf32>
    %675 = vector.multi_reduction <add>, %674, %cst_156 [0] : vector<8x256xf32> to vector<256xf32>
    %676 = vector.shape_cast %675 : vector<256xf32> to vector<1x256xf32>
    %677 = arith.addf %676, %295 : vector<1x256xf32>
    %678 = arith.select %134, %295, %677 : vector<1x256xi1>, vector<1x256xf32>
    %679 = arith.mulf %182, %36 : vector<8x256xf32>
    %cst_157 = arith.constant dense<0.000000e+00> : vector<256xf32>
    %680 = vector.multi_reduction <add>, %679, %cst_157 [0] : vector<8x256xf32> to vector<256xf32>
    %681 = vector.shape_cast %680 : vector<256xf32> to vector<1x256xf32>
    %682 = arith.addf %681, %298 : vector<1x256xf32>
    %683 = arith.select %136, %298, %682 : vector<1x256xi1>, vector<1x256xf32>
    %684 = arith.mulf %201, %36 : vector<8x256xf32>
    %cst_158 = arith.constant dense<0.000000e+00> : vector<256xf32>
    %685 = vector.multi_reduction <add>, %684, %cst_158 [0] : vector<8x256xf32> to vector<256xf32>
    %686 = vector.shape_cast %685 : vector<256xf32> to vector<1x256xf32>
    %687 = arith.addf %686, %301 : vector<1x256xf32>
    %688 = arith.select %138, %301, %687 : vector<1x256xi1>, vector<1x256xf32>
    %689 = arith.mulf %220, %36 : vector<8x256xf32>
    %cst_159 = arith.constant dense<0.000000e+00> : vector<256xf32>
    %690 = vector.multi_reduction <add>, %689, %cst_159 [0] : vector<8x256xf32> to vector<256xf32>
    %691 = vector.shape_cast %690 : vector<256xf32> to vector<1x256xf32>
    %692 = arith.addf %691, %304 : vector<1x256xf32>
    %693 = arith.select %140, %304, %692 : vector<1x256xi1>, vector<1x256xf32>
    %694 = arith.mulf %239, %36 : vector<8x256xf32>
    %cst_160 = arith.constant dense<0.000000e+00> : vector<256xf32>
    %695 = vector.multi_reduction <add>, %694, %cst_160 [0] : vector<8x256xf32> to vector<256xf32>
    %696 = vector.shape_cast %695 : vector<256xf32> to vector<1x256xf32>
    %697 = arith.addf %696, %307 : vector<1x256xf32>
    %698 = arith.select %142, %307, %697 : vector<1x256xi1>, vector<1x256xf32>
    %699 = arith.mulf %258, %36 : vector<8x256xf32>
    %cst_161 = arith.constant dense<0.000000e+00> : vector<256xf32>
    %700 = vector.multi_reduction <add>, %699, %cst_161 [0] : vector<8x256xf32> to vector<256xf32>
    %701 = vector.shape_cast %700 : vector<256xf32> to vector<1x256xf32>
    %702 = arith.addf %701, %310 : vector<1x256xf32>
    %703 = arith.select %144, %310, %702 : vector<1x256xi1>, vector<1x256xf32>
    %704 = arith.maximumf %678, %683 : vector<1x256xf32>
    %705 = arith.maximumf %704, %688 : vector<1x256xf32>
    %706 = arith.maximumf %705, %693 : vector<1x256xf32>
    %707 = arith.maximumf %706, %698 : vector<1x256xf32>
    %708 = arith.maximumf %707, %703 : vector<1x256xf32>
    %709 = arith.subf %678, %708 : vector<1x256xf32>
    %710 = math.exp %709 : vector<1x256xf32>
    %711 = arith.subf %683, %708 : vector<1x256xf32>
    %712 = math.exp %711 : vector<1x256xf32>
    %713 = arith.subf %688, %708 : vector<1x256xf32>
    %714 = math.exp %713 : vector<1x256xf32>
    %715 = arith.subf %693, %708 : vector<1x256xf32>
    %716 = math.exp %715 : vector<1x256xf32>
    %717 = arith.subf %698, %708 : vector<1x256xf32>
    %718 = math.exp %717 : vector<1x256xf32>
    %719 = arith.subf %703, %708 : vector<1x256xf32>
    %720 = math.exp %719 : vector<1x256xf32>
    %721 = arith.addf %710, %712 : vector<1x256xf32>
    %722 = arith.addf %721, %714 : vector<1x256xf32>
    %723 = arith.addf %722, %716 : vector<1x256xf32>
    %724 = arith.addf %723, %718 : vector<1x256xf32>
    %725 = arith.addf %724, %720 : vector<1x256xf32>
    %726 = tpu.reciprocal %725 : vector<1x256xf32> -> vector<1x256xf32>
    %727 = arith.mulf %710, %726 : vector<1x256xf32>
    %cst_162 = arith.constant 0.166666672 : f32
    %728 = vector.broadcast %cst_162 : f32 to vector<1x256xf32>
    %729 = arith.subf %727, %728 : vector<1x256xf32>
    %cst_163 = arith.constant 0.000000e+00 : f32
    %730 = vector.broadcast %cst_163 : f32 to vector<1x256xf32>
    %731 = arith.select %134, %730, %729 : vector<1x256xi1>, vector<1x256xf32>
    %732 = arith.mulf %731, %731 : vector<1x256xf32>
    %733 = arith.addf %673, %732 : vector<1x256xf32>
    %734 = arith.mulf %712, %726 : vector<1x256xf32>
    %cst_164 = arith.constant 0.166666672 : f32
    %735 = vector.broadcast %cst_164 : f32 to vector<1x256xf32>
    %736 = arith.subf %734, %735 : vector<1x256xf32>
    %cst_165 = arith.constant 0.000000e+00 : f32
    %737 = vector.broadcast %cst_165 : f32 to vector<1x256xf32>
    %738 = arith.select %136, %737, %736 : vector<1x256xi1>, vector<1x256xf32>
    %739 = arith.mulf %738, %738 : vector<1x256xf32>
    %740 = arith.addf %733, %739 : vector<1x256xf32>
    %741 = arith.mulf %714, %726 : vector<1x256xf32>
    %cst_166 = arith.constant 0.166666672 : f32
    %742 = vector.broadcast %cst_166 : f32 to vector<1x256xf32>
    %743 = arith.subf %741, %742 : vector<1x256xf32>
    %cst_167 = arith.constant 0.000000e+00 : f32
    %744 = vector.broadcast %cst_167 : f32 to vector<1x256xf32>
    %745 = arith.select %138, %744, %743 : vector<1x256xi1>, vector<1x256xf32>
    %746 = arith.mulf %745, %745 : vector<1x256xf32>
    %747 = arith.addf %740, %746 : vector<1x256xf32>
    %748 = arith.mulf %716, %726 : vector<1x256xf32>
    %cst_168 = arith.constant 0.166666672 : f32
    %749 = vector.broadcast %cst_168 : f32 to vector<1x256xf32>
    %750 = arith.subf %748, %749 : vector<1x256xf32>
    %cst_169 = arith.constant 0.000000e+00 : f32
    %751 = vector.broadcast %cst_169 : f32 to vector<1x256xf32>
    %752 = arith.select %140, %751, %750 : vector<1x256xi1>, vector<1x256xf32>
    %753 = arith.mulf %752, %752 : vector<1x256xf32>
    %754 = arith.addf %747, %753 : vector<1x256xf32>
    %755 = arith.mulf %718, %726 : vector<1x256xf32>
    %cst_170 = arith.constant 0.166666672 : f32
    %756 = vector.broadcast %cst_170 : f32 to vector<1x256xf32>
    %757 = arith.subf %755, %756 : vector<1x256xf32>
    %cst_171 = arith.constant 0.000000e+00 : f32
    %758 = vector.broadcast %cst_171 : f32 to vector<1x256xf32>
    %759 = arith.select %142, %758, %757 : vector<1x256xi1>, vector<1x256xf32>
    %760 = arith.mulf %759, %759 : vector<1x256xf32>
    %761 = arith.addf %754, %760 : vector<1x256xf32>
    %762 = arith.mulf %720, %726 : vector<1x256xf32>
    %cst_172 = arith.constant 0.166666672 : f32
    %763 = vector.broadcast %cst_172 : f32 to vector<1x256xf32>
    %764 = arith.subf %762, %763 : vector<1x256xf32>
    %cst_173 = arith.constant 0.000000e+00 : f32
    %765 = vector.broadcast %cst_173 : f32 to vector<1x256xf32>
    %766 = arith.select %144, %765, %764 : vector<1x256xi1>, vector<1x256xf32>
    %767 = arith.mulf %766, %766 : vector<1x256xf32>
    %768 = arith.addf %761, %767 : vector<1x256xf32>
    %c0_174 = arith.constant 0 : index
    %c0_175 = arith.constant 0 : index
    %769 = vector.load %arg10[%c0_174, %c0_175] : memref<1x256xf32, #tpu.memory_space<vmem>>, vector<1x256xf32>
    %770 = arith.addf %769, %768 : vector<1x256xf32>
    %c0_176 = arith.constant 0 : index
    %c0_177 = arith.constant 0 : index
    %771 = vector.load %arg10[%c0_176, %c0_177] : memref<1x256xf32, #tpu.memory_space<vmem>>, vector<1x256xf32>
    tpu.vector_store %arg10[%c0_176, %c0_177], %770 {strides = array<i32>} : memref<1x256xf32, #tpu.memory_space<vmem>>, vector<1x256xf32>,
    %c0_i32_178 = arith.constant 0 : i32
    %772 = arith.cmpi eq, %arg1, %c0_i32_178 : i32
    %773 = arith.extui %772 : i1 to i32
    %c0_i32_179 = arith.constant 0 : i32
    %774 = arith.cmpi ne, %773, %c0_i32_179 : i32
    scf.if %774 {
      %c0_180 = arith.constant 0 : index
      %c0_181 = arith.constant 0 : index
      %775 = vector.load %arg8[%c0_180, %c0_181] : memref<8x256xf32, #tpu.memory_space<vmem>>, vector<8x256xf32>
      %776 = vector.shape_cast %775 : vector<8x256xf32> to vector<1x8x256xf32>
      %cst_182 = arith.constant dense<0.000000e+00> : vector<1xf32>
      %777 = vector.multi_reduction <add>, %776, %cst_182 [1, 2] : vector<1x8x256xf32> to vector<1xf32>
      %778 = vector.shape_cast %777 : vector<1xf32> to vector<1x1x1xf32>
      %779 = vector.extract %778[0, 0, 0] : f32 from vector<1x1x1xf32>
      %780 = vector.broadcast %779 : f32 to vector<1x1x1xf32>
      %c0_183 = arith.constant 0 : index
      %c0_184 = arith.constant 0 : index
      %c0_185 = arith.constant 0 : index
      %781 = vector.load %arg5[%c0_183, %c0_184, %c0_185] : memref<1x1x1xf32, #tpu.memory_space<vmem>>, vector<1x1x1xf32>
      tpu.vector_store %arg5[%c0_183, %c0_184, %c0_185], %780 {strides = array<i32>} : memref<1x1x1xf32, #tpu.memory_space<vmem>>, vector<1x1x1xf32>,
      %c0_186 = arith.constant 0 : index
      %c0_187 = arith.constant 0 : index
      %782 = vector.load %arg9[%c0_186, %c0_187] : memref<1x256xf32, #tpu.memory_space<vmem>>, vector<1x256xf32>
      %783 = vector.shape_cast %782 : vector<1x256xf32> to vector<1x1x256xf32>
      %cst_188 = arith.constant dense<0.000000e+00> : vector<1xf32>
      %784 = vector.multi_reduction <add>, %783, %cst_188 [1, 2] : vector<1x1x256xf32> to vector<1xf32>
      %785 = vector.shape_cast %784 : vector<1xf32> to vector<1x1x1xf32>
      %786 = vector.extract %785[0, 0, 0] : f32 from vector<1x1x1xf32>
      %cst_189 = arith.constant 0.166666672 : f32
      %787 = arith.mulf %786, %cst_189 : f32
      %788 = vector.broadcast %787 : f32 to vector<1x1x1xf32>
      %c0_190 = arith.constant 0 : index
      %c0_191 = arith.constant 0 : index
      %c0_192 = arith.constant 0 : index
      %789 = vector.load %arg6[%c0_190, %c0_191, %c0_192] : memref<1x1x1xf32, #tpu.memory_space<vmem>>, vector<1x1x1xf32>
      tpu.vector_store %arg6[%c0_190, %c0_191, %c0_192], %788 {strides = array<i32>} : memref<1x1x1xf32, #tpu.memory_space<vmem>>, vector<1x1x1xf32>,
      %c0_193 = arith.constant 0 : index
      %c0_194 = arith.constant 0 : index
      %790 = vector.load %arg10[%c0_193, %c0_194] : memref<1x256xf32, #tpu.memory_space<vmem>>, vector<1x256xf32>
      %791 = vector.shape_cast %790 : vector<1x256xf32> to vector<1x1x256xf32>
      %cst_195 = arith.constant dense<0.000000e+00> : vector<1xf32>
      %792 = vector.multi_reduction <add>, %791, %cst_195 [1, 2] : vector<1x1x256xf32> to vector<1xf32>
      %793 = vector.shape_cast %792 : vector<1xf32> to vector<1x1x1xf32>
      %794 = vector.extract %793[0, 0, 0] : f32 from vector<1x1x1xf32>
      %795 = vector.broadcast %794 : f32 to vector<1x1x1xf32>
      %c0_196 = arith.constant 0 : index
      %c0_197 = arith.constant 0 : index
      %c0_198 = arith.constant 0 : index
      %796 = vector.load %arg7[%c0_196, %c0_197, %c0_198] : memref<1x1x1xf32, #tpu.memory_space<vmem>>, vector<1x1x1xf32>
      tpu.vector_store %arg7[%c0_196, %c0_197, %c0_198], %795 {strides = array<i32>} : memref<1x1x1xf32, #tpu.memory_space<vmem>>, vector<1x1x1xf32>,
    } else {
    }
    return
  }
  func.func @transform_0(%arg0: i32, %arg1: i32, %arg2: memref<24xf32, #tpu.memory_space<smem>>) -> (i32, i32) {
    %c1_i32 = arith.constant 1 : i32
    %0 = arith.muli %arg0, %c1_i32 : i32
    %1 = arith.addi %0, %arg1 : i32
    %c0_i32 = arith.constant 0 : i32
    %c0_i32_0 = arith.constant 0 : i32
    return %c0_i32, %1 : i32, i32
  }
  func.func @transform_1(%arg0: i32, %arg1: i32, %arg2: memref<24xf32, #tpu.memory_space<smem>>) -> (i32, i32, i32) {
    %c1_i32 = arith.constant 1 : i32
    %0 = arith.muli %arg0, %c1_i32 : i32
    %1 = arith.addi %0, %arg1 : i32
    %c0_i32 = arith.constant 0 : i32
    %c0_i32_0 = arith.constant 0 : i32
    %c0_i32_1 = arith.constant 0 : i32
    return %c0_i32, %c0_i32_0, %1 : i32, i32, i32
  }
  func.func @transform_2(%arg0: i32, %arg1: i32, %arg2: memref<24xf32, #tpu.memory_space<smem>>) -> (i32, i32, i32) {
    %c0_i32 = arith.constant 0 : i32
    %c0_i32_0 = arith.constant 0 : i32
    %c0_i32_1 = arith.constant 0 : i32
    return %arg0, %c0_i32, %c0_i32_0 : i32, i32, i32
  }
  func.func @transform_3(%arg0: i32, %arg1: i32, %arg2: memref<24xf32, #tpu.memory_space<smem>>) -> (i32, i32, i32) {
    %c0_i32 = arith.constant 0 : i32
    %c0_i32_0 = arith.constant 0 : i32
    %c0_i32_1 = arith.constant 0 : i32
    return %arg0, %c0_i32, %c0_i32_0 : i32, i32, i32
  }
  func.func @transform_4(%arg0: i32, %arg1: i32, %arg2: memref<24xf32, #tpu.memory_space<smem>>) -> (i32, i32, i32) {
    %c0_i32 = arith.constant 0 : i32
    %c0_i32_0 = arith.constant 0 : i32
    %c0_i32_1 = arith.constant 0 : i32
    return %arg0, %c0_i32, %c0_i32_0 : i32, i32, i32
  }
}

</mosaic_0001>

<llo_original>
// kernel: tpu_custom_call.1
$region0: #{tpu_custom_call.1}
  #allocation0 [shape = 'u32[]', space=smem, size = 0x4, offset = 0x4, fixed_abs, tag = 'smem constant byte address 0x4 - core index']
  #allocation1 [shape = 'u32[72,128]{1,0:T(1,128)}', space=vmem, size = 0x9000, scoped, tag = 'internal scratch']
  #allocation2 [shape = 'f32[8,256]{1,0:T(8,128)}', space=vmem, size = 0x2000, scoped, tag = 'scratch operand']
  #allocation3 [shape = 'f32[1,256]{1,0:T(1,128)}', space=vmem, size = 0x400, scoped, tag = 'scratch operand']
  #allocation4 [shape = 'f32[1,256]{1,0:T(1,128)}', space=vmem, size = 0x400, scoped, tag = 'scratch operand']
  #allocation5 [shape = 's32[1]{0}', space=sflag, size = 0x4, scoped, tag = 'scoped memory for tpu_custom_call.1']
  #allocation6 [shape = 'u8[512]{0}', space=smem, size = 0x200, scoped, tag = 'prefetched SMEM operand 0']
  %s0 = inlined_call_operand.hbm [shape: f32[24], index: 0, kind: input, shape index: {}]
  %s1 = inlined_call_operand.hbm [shape: s32[4,256], index: 1, kind: input, shape index: {}]
  %s2 = inlined_call_operand.hbm [shape: f32[4,8,256], index: 2, kind: input, shape index: {}]
  %s3 = inlined_call_operand.hbm [shape: f32[1,1,1], index: 3, kind: output, shape index: {0}]
  %s4 = inlined_call_operand.hbm [shape: f32[1,1,1], index: 4, kind: output, shape index: {1}]
  %s5 = inlined_call_operand.hbm [shape: f32[1,1,1], index: 5, kind: output, shape index: {2}]
  %6 = xla_tuple %s3, %s4, %s5
  %s7 = sld [smem:[#allocation0]]
  $region50: #{tpu_custom_call.1} parent=0
    _
  %s9 = ssub.s32 1, %s7
  %s10 = scalar_select 0, %s9, %s7
  %s12 = sshll.u32 %s0, 4
  %s13 = int_to_ptr.hbm [resolvable:$true] %s12
  %15 = dma.hbm_to_smem %s13, 16, [#allocation6], [#allocation5]
  %17 = dma.done [#allocation5], 16
  %18 = sfence
  $region1: #{tpu_custom_call.1} parent=0
    #allocation7 [shape = 'u8[4096]{0}', space=vmem, size = 0x1000, scoped, tag = 'input window, operand 1, single buffered']
    #allocation8 [shape = 's32[1]{0}', space=sflag, size = 0x4, scoped, tag = 'scoped memory for tpu_custom_call.1']
    #allocation9 [shape = 's32[1]{0}', space=sflag, size = 0x4, scoped, tag = 'scoped memory for tpu_custom_call.1']
    #allocation10 [shape = 'u8[32768]{0}', space=vmem, size = 0x8000, scoped, tag = 'input window, operand 2, single buffered']
    #allocation11 [shape = 's32[1]{0}', space=sflag, size = 0x4, scoped, tag = 'scoped memory for tpu_custom_call.1']
    #allocation12 [shape = 'u8[512]{0}', space=vmem, size = 0x400, scoped, tag = 'output window, operand 0, single buffered']
    #allocation13 [shape = 'u8[512]{0}', space=vmem, size = 0x400, scoped, tag = 'output window, operand 1, single buffered']
    #allocation14 [shape = 's32[1]{0}', space=sflag, size = 0x4, scoped, tag = 'scoped memory for tpu_custom_call.1']
    #allocation15 [shape = 'u8[512]{0}', space=vmem, size = 0x400, scoped, tag = 'output window, operand 2, single buffered']
    %19 = vsyncpa [#allocation8], 0
    %20 = vsyncpa [#allocation11], 0
    %21 = vsyncpa [#allocation9], 0
    %22 = vsyncpa [#allocation14], 0
    // Predicated region
    $region2: #{tpu_custom_call.1} parent=1 // pred_check
      _
    $region3: #{tpu_custom_call.1} parent=1 // pred_check_branch
      %24 = sbr.rel (0) target = $region5
    $region4: #{tpu_custom_call.1} parent=1 // pred_region
      %s25 = sadd.s32 0, 0
      %s26 = smul.u32 2, %s25
      %28 = vsyncadd [#allocation8], 0
      %s29 = smul.addr %s26, 4
      %s30 = scalar_lea.hbm %s1, %s29
      %s32 = sshll.u32 %s30, 4
      %s33 = int_to_ptr.hbm [resolvable:$true] %s32
      %s34 = sshll.u32 [#allocation7], 4
      %s35 = int_to_ptr.vmem [resolvable:$true] %s34
      %37 = dma.hbm_to_vmem [thread:$0]  %s33, 128, %s35, [#allocation8]
    $region5: #{tpu_custom_call.1} parent=1 // pred_fallthru
      _
    // Predicated region
    $region6: #{tpu_custom_call.1} parent=1 // pred_check
      _
    $region7: #{tpu_custom_call.1} parent=1 // pred_check_branch
      %39 = sbr.rel (0) target = $region9
    $region8: #{tpu_custom_call.1} parent=1 // pred_region
      %s40 = sadd.s32 0, 0
      %s41 = smul.u32 2, %s40
      %43 = vsyncadd [#allocation11], 0
      %s44 = smul.addr %s41, 8
      %s45 = scalar_lea.hbm %s2, %s44
      %s46 = sshll.u32 %s45, 4
      %s47 = int_to_ptr.hbm [resolvable:$true] %s46
      %s48 = sshll.u32 [#allocation10], 4
      %s49 = int_to_ptr.vmem [resolvable:$true] %s48
      %54 = dma.hbm_to_vmem [thread:$0]  %s47, 1024, %s49, [#allocation11], 256, 256, 16
    $region9: #{tpu_custom_call.1} parent=1 // pred_fallthru
      _
    // Predicated region
    $region10: #{tpu_custom_call.1} parent=1 // pred_check
      _
    $region11: #{tpu_custom_call.1} parent=1 // pred_check_branch
      %56 = sbr.rel (0) target = $region13
    $region12: #{tpu_custom_call.1} parent=1 // pred_region
      %58 = dma.done [#allocation8], 128
    $region13: #{tpu_custom_call.1} parent=1 // pred_fallthru
      _
    // Predicated region
    $region14: #{tpu_custom_call.1} parent=1 // pred_check
      _
    $region15: #{tpu_custom_call.1} parent=1 // pred_check_branch
      %60 = sbr.rel (0) target = $region17
    $region16: #{tpu_custom_call.1} parent=1 // pred_region
      %62 = dma.done [#allocation11], 1024
    $region17: #{tpu_custom_call.1} parent=1 // pred_fallthru
      _
    %s63 = sadd.s32 0, 0
    %s64 = smul.u32 2, %s63
    %s65 = sadd.s32 0, 0
    %s66 = smul.u32 2, %s65
    %p67 = scmp.eq.s32.totalorder 0, 0
    // Predicated region
    $region18: #{tpu_custom_call.1} parent=1 // pred_check
      %p68 = pneg %p67
    $region19: #{tpu_custom_call.1} parent=1 // pred_check_branch
      %70 = sbr.rel (%p68) target = $region21
    $region20: #{tpu_custom_call.1} parent=1 // pred_region
      %71 = vst [vmem:[#allocation2] sm:$0xff] 0.0
      %72 = vst [vmem:[#allocation2 + $0x8] sm:$0xff] 0.0
      %v73 = vlaneseq
      %vm74 = vcmp.ge.s32.totalorder %v73, 0
      %vm75 = vcmp.lt.s32.totalorder %v73, 256
      %vm76 = vmand %vm74, %vm75
      %77 = vst.msk [vmem:[#allocation3] sm:$0x3] %vm76, 0.0
      %78 = vst.msk [vmem:[#allocation4] sm:$0x3] %vm76, 0.0
    $region21: #{tpu_custom_call.1} parent=1 // pred_fallthru
      _
    %v79 = vld [vmem:[#allocation10] sm:$0xff]
    %v80 = vld [vmem:[#allocation10 + $0x8] sm:$0xff]
    %v81 = vld [vmem:[#allocation10 + $0x10] sm:$0xff]
    %v82 = vld [vmem:[#allocation10 + $0x18] sm:$0xff]
    %v83 = vld [vmem:[#allocation10 + $0x20] sm:$0xff]
    %v84 = vld [vmem:[#allocation10 + $0x28] sm:$0xff]
    %v85 = vld [vmem:[#allocation10 + $0x30] sm:$0xff]
    %v86 = vld [vmem:[#allocation10 + $0x38] sm:$0xff]
    %v87 = vld [vmem:[#allocation7] sm:$0xff]
    %s88 = sld [smem:[#allocation6]]
    %s89 = sld [smem:[#allocation6 + $0x1]]
    %s90 = sld [smem:[#allocation6 + $0x2]]
    %s91 = sld [smem:[#allocation6 + $0x3]]
    %s92 = sld [smem:[#allocation6 + $0x4]]
    %s93 = sld [smem:[#allocation6 + $0x5]]
    %s94 = sld [smem:[#allocation6 + $0x6]]
    %s95 = sld [smem:[#allocation6 + $0x7]]
    %s96 = sld [smem:[#allocation6 + $0x8]]
    %s97 = sld [smem:[#allocation6 + $0x9]]
    %s98 = sld [smem:[#allocation6 + $0xa]]
    %s99 = sld [smem:[#allocation6 + $0xb]]
    %s100 = sld [smem:[#allocation6 + $0xc]]
    %s101 = sld [smem:[#allocation6 + $0xd]]
    %s102 = sld [smem:[#allocation6 + $0xe]]
    %s103 = sld [smem:[#allocation6 + $0xf]]
    %s104 = sld [smem:[#allocation6 + $0x10]]
    %s105 = sld [smem:[#allocation6 + $0x11]]
    %s106 = sld [smem:[#allocation6 + $0x12]]
    %s107 = sld [smem:[#allocation6 + $0x13]]
    %s108 = sld [smem:[#allocation6 + $0x14]]
    %s109 = sld [smem:[#allocation6 + $0x15]]
    %s110 = sld [smem:[#allocation6 + $0x16]]
    %s111 = sld [smem:[#allocation6 + $0x17]]
    %v112 = vperm.slane %v87, 0
    %v113 = vperm.slane %v87, 4
    %v114 = vperm.slane %v112, 0
    %v115 = vperm.slane %v113, 0
    %v116 = vperm.slane %v87, 1
    %v117 = vperm.slane %v87, 5
    %v118 = vperm.slane %v116, 1
    %v119 = vperm.slane %v117, 1
    %v120 = vperm.slane %v87, 2
    %v121 = vperm.slane %v87, 6
    %v122 = vperm.slane %v120, 2
    %v123 = vperm.slane %v121, 2
    %v124 = vperm.slane %v87, 3
    %v125 = vperm.slane %v87, 7
    %v126 = vperm.slane %v124, 3
    %v127 = vperm.slane %v125, 3
    %vm128 = vcmp.eq.s32.totalorder %v114, 0
    %vm129 = vcmp.eq.s32.totalorder %v115, 0
    %vm130 = vcmp.eq.s32.totalorder %v114, 1
    %vm131 = vcmp.eq.s32.totalorder %v115, 1
    %vm132 = vcmp.eq.s32.totalorder %v114, 2
    %vm133 = vcmp.eq.s32.totalorder %v115, 2
    %vm134 = vcmp.eq.s32.totalorder %v114, 3
    %vm135 = vcmp.eq.s32.totalorder %v115, 3
    %vm136 = vcmp.eq.s32.totalorder %v114, 4
    %vm137 = vcmp.eq.s32.totalorder %v115, 4
    %vm138 = vcmp.eq.s32.totalorder %v114, 5
    %vm139 = vcmp.eq.s32.totalorder %v115, 5
    %vm140 = vcmp.eq.s32.totalorder %v118, 0
    %vm141 = vcmp.eq.s32.totalorder %v119, 0
    %vm142 = vcmp.eq.s32.totalorder %v118, 1
    %vm143 = vcmp.eq.s32.totalorder %v119, 1
    %vm144 = vcmp.eq.s32.totalorder %v118, 2
    %vm145 = vcmp.eq.s32.totalorder %v119, 2
    %vm146 = vcmp.eq.s32.totalorder %v118, 3
    %vm147 = vcmp.eq.s32.totalorder %v119, 3
    %vm148 = vcmp.eq.s32.totalorder %v118, 4
    %vm149 = vcmp.eq.s32.totalorder %v119, 4
    %vm150 = vcmp.eq.s32.totalorder %v118, 5
    %vm151 = vcmp.eq.s32.totalorder %v119, 5
    %vm152 = vcmp.eq.s32.totalorder %v122, 0
    %vm153 = vcmp.eq.s32.totalorder %v123, 0
    %vm154 = vcmp.eq.s32.totalorder %v122, 1
    %vm155 = vcmp.eq.s32.totalorder %v123, 1
    %vm156 = vcmp.eq.s32.totalorder %v122, 2
    %vm157 = vcmp.eq.s32.totalorder %v123, 2
    %vm158 = vcmp.eq.s32.totalorder %v122, 3
    %vm159 = vcmp.eq.s32.totalorder %v123, 3
    %vm160 = vcmp.eq.s32.totalorder %v122, 4
    %vm161 = vcmp.eq.s32.totalorder %v123, 4
    %vm162 = vcmp.eq.s32.totalorder %v122, 5
    %vm163 = vcmp.eq.s32.totalorder %v123, 5
    %vm164 = vcmp.eq.s32.totalorder %v126, 0
    %vm165 = vcmp.eq.s32.totalorder %v127, 0
    %vm166 = vcmp.eq.s32.totalorder %v126, 1
    %vm167 = vcmp.eq.s32.totalorder %v127, 1
    %vm168 = vcmp.eq.s32.totalorder %v126, 2
    %vm169 = vcmp.eq.s32.totalorder %v127, 2
    %vm170 = vcmp.eq.s32.totalorder %v126, 3
    %vm171 = vcmp.eq.s32.totalorder %v127, 3
    %vm172 = vcmp.eq.s32.totalorder %v126, 4
    %vm173 = vcmp.eq.s32.totalorder %v127, 4
    %vm174 = vcmp.eq.s32.totalorder %v126, 5
    %vm175 = vcmp.eq.s32.totalorder %v127, 5
    %vm176 = vcmp.eq.s32.totalorder %v87, 0
    %vm177 = vcmp.eq.s32.totalorder %v87, 1
    %vm178 = vcmp.eq.s32.totalorder %v87, 2
    %vm179 = vcmp.eq.s32.totalorder %v87, 3
    %vm180 = vcmp.eq.s32.totalorder %v87, 4
    %vm181 = vcmp.eq.s32.totalorder %v87, 5
    %v182 = vstv %s88
    %v183 = vsel %vm128, %v182, 0.0
    %v184 = vsel %vm129, %v182, 0.0
    %v185 = vmul.f32 %v183, %v79
    %v186 = vmul.f32 %v184, %v80
    %v187 = vstv %s94
    %v188 = vsel %vm140, %v187, 0.0
    %v189 = vsel %vm141, %v187, 0.0
    %v190 = vmul.f32 %v188, %v81
    %v191 = vmul.f32 %v189, %v82
    %v192 = vadd.f32 %v185, %v190
    %v193 = vadd.f32 %v186, %v191
    %v194 = vstv %s100
    %v195 = vsel %vm152, %v194, 0.0
    %v196 = vsel %vm153, %v194, 0.0
    %v197 = vmul.f32 %v195, %v83
    %v198 = vmul.f32 %v196, %v84
    %v199 = vadd.f32 %v192, %v197
    %v200 = vadd.f32 %v193, %v198
    %v201 = vstv %s106
    %v202 = vsel %vm164, %v201, 0.0
    %v203 = vsel %vm165, %v201, 0.0
    %v204 = vmul.f32 %v202, %v85
    %v205 = vmul.f32 %v203, %v86
    %v206 = vadd.f32 %v199, %v204
    %v207 = vadd.f32 %v200, %v205
    %v208 = vstv %s89
    %v209 = vsel %vm130, %v208, 0.0
    %v210 = vsel %vm131, %v208, 0.0
    %v211 = vmul.f32 %v209, %v79
    %v212 = vmul.f32 %v210, %v80
    %v213 = vstv %s95
    %v214 = vsel %vm142, %v213, 0.0
    %v215 = vsel %vm143, %v213, 0.0
    %v216 = vmul.f32 %v214, %v81
    %v217 = vmul.f32 %v215, %v82
    %v218 = vadd.f32 %v211, %v216
    %v219 = vadd.f32 %v212, %v217
    %v220 = vstv %s101
    %v221 = vsel %vm154, %v220, 0.0
    %v222 = vsel %vm155, %v220, 0.0
    %v223 = vmul.f32 %v221, %v83
    %v224 = vmul.f32 %v222, %v84
    %v225 = vadd.f32 %v218, %v223
    %v226 = vadd.f32 %v219, %v224
    %v227 = vstv %s107
    %v228 = vsel %vm166, %v227, 0.0
    %v229 = vsel %vm167, %v227, 0.0
    %v230 = vmul.f32 %v228, %v85
    %v231 = vmul.f32 %v229, %v86
    %v232 = vadd.f32 %v225, %v230
    %v233 = vadd.f32 %v226, %v231
    %v234 = vstv %s90
    %v235 = vsel %vm132, %v234, 0.0
    %v236 = vsel %vm133, %v234, 0.0
    %v237 = vmul.f32 %v235, %v79
    %v238 = vmul.f32 %v236, %v80
    %v239 = vstv %s96
    %v240 = vsel %vm144, %v239, 0.0
    %v241 = vsel %vm145, %v239, 0.0
    %v242 = vmul.f32 %v240, %v81
    %v243 = vmul.f32 %v241, %v82
    %v244 = vadd.f32 %v237, %v242
    %v245 = vadd.f32 %v238, %v243
    %v246 = vstv %s102
    %v247 = vsel %vm156, %v246, 0.0
    %v248 = vsel %vm157, %v246, 0.0
    %v249 = vmul.f32 %v247, %v83
    %v250 = vmul.f32 %v248, %v84
    %v251 = vadd.f32 %v244, %v249
    %v252 = vadd.f32 %v245, %v250
    %v253 = vstv %s108
    %v254 = vsel %vm168, %v253, 0.0
    %v255 = vsel %vm169, %v253, 0.0
    %v256 = vmul.f32 %v254, %v85
    %v257 = vmul.f32 %v255, %v86
    %v258 = vadd.f32 %v251, %v256
    %v259 = vadd.f32 %v252, %v257
    %v260 = vstv %s91
    %v261 = vsel %vm134, %v260, 0.0
    %v262 = vsel %vm135, %v260, 0.0
    %v263 = vmul.f32 %v261, %v79
    %v264 = vmul.f32 %v262, %v80
    %v265 = vstv %s97
    %v266 = vsel %vm146, %v265, 0.0
    %v267 = vsel %vm147, %v265, 0.0
    %v268 = vmul.f32 %v266, %v81
    %v269 = vmul.f32 %v267, %v82
    %v270 = vadd.f32 %v263, %v268
    %v271 = vadd.f32 %v264, %v269
    %v272 = vstv %s103
    %v273 = vsel %vm158, %v272, 0.0
    %v274 = vsel %vm159, %v272, 0.0
    %v275 = vmul.f32 %v273, %v83
    %v276 = vmul.f32 %v274, %v84
    %v277 = vadd.f32 %v270, %v275
    %v278 = vadd.f32 %v271, %v276
    %v279 = vstv %s109
    %v280 = vsel %vm170, %v279, 0.0
    %v281 = vsel %vm171, %v279, 0.0
    %v282 = vmul.f32 %v280, %v85
    %v283 = vmul.f32 %v281, %v86
    %v284 = vadd.f32 %v277, %v282
    %v285 = vadd.f32 %v278, %v283
    %v286 = vstv %s92
    %v287 = vsel %vm136, %v286, 0.0
    %v288 = vsel %vm137, %v286, 0.0
    %v289 = vmul.f32 %v287, %v79
    %v290 = vmul.f32 %v288, %v80
    %v291 = vstv %s98
    %v292 = vsel %vm148, %v291, 0.0
    %v293 = vsel %vm149, %v291, 0.0
    %v294 = vmul.f32 %v292, %v81
    %v295 = vmul.f32 %v293, %v82
    %v296 = vadd.f32 %v289, %v294
    %v297 = vadd.f32 %v290, %v295
    %v298 = vstv %s104
    %v299 = vsel %vm160, %v298, 0.0
    %v300 = vsel %vm161, %v298, 0.0
    %v301 = vmul.f32 %v299, %v83
    %v302 = vmul.f32 %v300, %v84
    %v303 = vadd.f32 %v296, %v301
    %v304 = vadd.f32 %v297, %v302
    %v305 = vstv %s110
    %v306 = vsel %vm172, %v305, 0.0
    %v307 = vsel %vm173, %v305, 0.0
    %v308 = vmul.f32 %v306, %v85
    %v309 = vmul.f32 %v307, %v86
    %v310 = vadd.f32 %v303, %v308
    %v311 = vadd.f32 %v304, %v309
    %v312 = vstv %s93
    %v313 = vsel %vm138, %v312, 0.0
    %v314 = vsel %vm139, %v312, 0.0
    %v315 = vmul.f32 %v313, %v79
    %v316 = vmul.f32 %v314, %v80
    %v317 = vstv %s99
    %v318 = vsel %vm150, %v317, 0.0
    %v319 = vsel %vm151, %v317, 0.0
    %v320 = vmul.f32 %v318, %v81
    %v321 = vmul.f32 %v319, %v82
    %v322 = vadd.f32 %v315, %v320
    %v323 = vadd.f32 %v316, %v321
    %v324 = vstv %s105
    %v325 = vsel %vm162, %v324, 0.0
    %v326 = vsel %vm163, %v324, 0.0
    %v327 = vmul.f32 %v325, %v83
    %v328 = vmul.f32 %v326, %v84
    %v329 = vadd.f32 %v322, %v327
    %v330 = vadd.f32 %v323, %v328
    %v331 = vstv %s111
    %v332 = vsel %vm174, %v331, 0.0
    %v333 = vsel %vm175, %v331, 0.0
    %v334 = vmul.f32 %v332, %v85
    %v335 = vmul.f32 %v333, %v86
    %v336 = vadd.f32 %v329, %v334
    %v337 = vadd.f32 %v330, %v335
    %v338 = vsel %vm136, %v310, %v336
    %v339 = vsel %vm137, %v311, %v337
    %v340 = vsel %vm134, %v284, %v338
    %v341 = vsel %vm135, %v285, %v339
    %v342 = vsel %vm132, %v258, %v340
    %v343 = vsel %vm133, %v259, %v341
    %v344 = vsel %vm130, %v232, %v342
    %v345 = vsel %vm131, %v233, %v343
    %v346 = vsel %vm128, %v206, %v344
    %v347 = vsel %vm129, %v207, %v345
    %v348 = vsub.f32 %v79, %v346
    %v349 = vsub.f32 %v80, %v347
    %v350 = vmul.f32 %v348, %v348
    %v351 = vmul.f32 %v349, %v349
    %v352 = vsel %vm148, %v310, %v336
    %v353 = vsel %vm149, %v311, %v337
    %v354 = vsel %vm146, %v284, %v352
    %v355 = vsel %vm147, %v285, %v353
    %v356 = vsel %vm144, %v258, %v354
    %v357 = vsel %vm145, %v259, %v355
    %v358 = vsel %vm142, %v232, %v356
    %v359 = vsel %vm143, %v233, %v357
    %v360 = vsel %vm140, %v206, %v358
    %v361 = vsel %vm141, %v207, %v359
    %v362 = vsub.f32 %v81, %v360
    %v363 = vsub.f32 %v82, %v361
    %v364 = vmul.f32 %v362, %v362
    %v365 = vmul.f32 %v363, %v363
    %v366 = vadd.f32 %v350, %v364
    %v367 = vadd.f32 %v351, %v365
    %v368 = vsel %vm160, %v310, %v336
    %v369 = vsel %vm161, %v311, %v337
    %v370 = vsel %vm158, %v284, %v368
    %v371 = vsel %vm159, %v285, %v369
    %v372 = vsel %vm156, %v258, %v370
    %v373 = vsel %vm157, %v259, %v371
    %v374 = vsel %vm154, %v232, %v372
    %v375 = vsel %vm155, %v233, %v373
    %v376 = vsel %vm152, %v206, %v374
    %v377 = vsel %vm153, %v207, %v375
    %v378 = vsub.f32 %v83, %v376
    %v379 = vsub.f32 %v84, %v377
    %v380 = vmul.f32 %v378, %v378
    %v381 = vmul.f32 %v379, %v379
    %v382 = vadd.f32 %v366, %v380
    %v383 = vadd.f32 %v367, %v381
    %v384 = vsel %vm172, %v310, %v336
    %v385 = vsel %vm173, %v311, %v337
    %v386 = vsel %vm170, %v284, %v384
    %v387 = vsel %vm171, %v285, %v385
    %v388 = vsel %vm168, %v258, %v386
    %v389 = vsel %vm169, %v259, %v387
    %v390 = vsel %vm166, %v232, %v388
    %v391 = vsel %vm167, %v233, %v389
    %v392 = vsel %vm164, %v206, %v390
    %v393 = vsel %vm165, %v207, %v391
    %v394 = vsub.f32 %v85, %v392
    %v395 = vsub.f32 %v86, %v393
    %v396 = vmul.f32 %v394, %v394
    %v397 = vmul.f32 %v395, %v395
    %v398 = vadd.f32 %v382, %v396
    %v399 = vadd.f32 %v383, %v397
    %v400 = vld [vmem:[#allocation2] sm:$0xff]
    %v401 = vld [vmem:[#allocation2 + $0x8] sm:$0xff]
    %v402 = vadd.f32 %v400, %v398
    %v403 = vadd.f32 %v401, %v399
    %404 = vst [vmem:[#allocation2] sm:$0xff] %v402
    %405 = vst [vmem:[#allocation2 + $0x8] sm:$0xff] %v403
    %v406 = vmul.f32 %v206, %v206
    %v407 = vmul.f32 %v207, %v207
    %v408 = vrot.slane %v406, 4
    %v409 = vadd.f32 %v406, %v408
    %v410 = vrot.slane %v409, 2
    %v411 = vadd.f32 %v409, %v410
    %v412 = vrot.slane %v411, 1
    %v413 = vadd.f32 %v411, %v412
    %v414 = vrot.slane %v407, 4
    %v415 = vadd.f32 %v407, %v414
    %v416 = vrot.slane %v415, 2
    %v417 = vadd.f32 %v415, %v416
    %v418 = vrot.slane %v417, 1
    %v419 = vadd.f32 %v417, %v418
    %v420 = vmul.f32 %v232, %v232
    %v421 = vmul.f32 %v233, %v233
    %v422 = vrot.slane %v420, 4
    %v423 = vadd.f32 %v420, %v422
    %v424 = vrot.slane %v423, 2
    %v425 = vadd.f32 %v423, %v424
    %v426 = vrot.slane %v425, 1
    %v427 = vadd.f32 %v425, %v426
    %v428 = vrot.slane %v421, 4
    %v429 = vadd.f32 %v421, %v428
    %v430 = vrot.slane %v429, 2
    %v431 = vadd.f32 %v429, %v430
    %v432 = vrot.slane %v431, 1
    %v433 = vadd.f32 %v431, %v432
    %v434 = vmul.f32 %v258, %v258
    %v435 = vmul.f32 %v259, %v259
    %v436 = vrot.slane %v434, 4
    %v437 = vadd.f32 %v434, %v436
    %v438 = vrot.slane %v437, 2
    %v439 = vadd.f32 %v437, %v438
    %v440 = vrot.slane %v439, 1
    %v441 = vadd.f32 %v439, %v440
    %v442 = vrot.slane %v435, 4
    %v443 = vadd.f32 %v435, %v442
    %v444 = vrot.slane %v443, 2
    %v445 = vadd.f32 %v443, %v444
    %v446 = vrot.slane %v445, 1
    %v447 = vadd.f32 %v445, %v446
    %v448 = vmul.f32 %v284, %v284
    %v449 = vmul.f32 %v285, %v285
    %v450 = vrot.slane %v448, 4
    %v451 = vadd.f32 %v448, %v450
    %v452 = vrot.slane %v451, 2
    %v453 = vadd.f32 %v451, %v452
    %v454 = vrot.slane %v453, 1
    %v455 = vadd.f32 %v453, %v454
    %v456 = vrot.slane %v449, 4
    %v457 = vadd.f32 %v449, %v456
    %v458 = vrot.slane %v457, 2
    %v459 = vadd.f32 %v457, %v458
    %v460 = vrot.slane %v459, 1
    %v461 = vadd.f32 %v459, %v460
    %v462 = vmul.f32 %v310, %v310
    %v463 = vmul.f32 %v311, %v311
    %v464 = vrot.slane %v462, 4
    %v465 = vadd.f32 %v462, %v464
    %v466 = vrot.slane %v465, 2
    %v467 = vadd.f32 %v465, %v466
    %v468 = vrot.slane %v467, 1
    %v469 = vadd.f32 %v467, %v468
    %v470 = vrot.slane %v463, 4
    %v471 = vadd.f32 %v463, %v470
    %v472 = vrot.slane %v471, 2
    %v473 = vadd.f32 %v471, %v472
    %v474 = vrot.slane %v473, 1
    %v475 = vadd.f32 %v473, %v474
    %v476 = vmul.f32 %v336, %v336
    %v477 = vmul.f32 %v337, %v337
    %v478 = vrot.slane %v476, 4
    %v479 = vadd.f32 %v476, %v478
    %v480 = vrot.slane %v479, 2
    %v481 = vadd.f32 %v479, %v480
    %v482 = vrot.slane %v481, 1
    %v483 = vadd.f32 %v481, %v482
    %v484 = vrot.slane %v477, 4
    %v485 = vadd.f32 %v477, %v484
    %v486 = vrot.slane %v485, 2
    %v487 = vadd.f32 %v485, %v486
    %v488 = vrot.slane %v487, 1
    %v489 = vadd.f32 %v487, %v488
    %v490 = vmul.f32 %v206, %v232
    %v491 = vmul.f32 %v207, %v233
    %v492 = vrot.slane %v490, 4
    %v493 = vadd.f32 %v490, %v492
    %v494 = vrot.slane %v493, 2
    %v495 = vadd.f32 %v493, %v494
    %v496 = vrot.slane %v495, 1
    %v497 = vadd.f32 %v495, %v496
    %v498 = vrot.slane %v491, 4
    %v499 = vadd.f32 %v491, %v498
    %v500 = vrot.slane %v499, 2
    %v501 = vadd.f32 %v499, %v500
    %v502 = vrot.slane %v501, 1
    %v503 = vadd.f32 %v501, %v502
    %v504 = vmul.f32 %v497, %v497
    %v505 = vmul.f32 %v503, %v503
    %v506 = vmul.f32 %v206, %v258
    %v507 = vmul.f32 %v207, %v259
    %v508 = vrot.slane %v506, 4
    %v509 = vadd.f32 %v506, %v508
    %v510 = vrot.slane %v509, 2
    %v511 = vadd.f32 %v509, %v510
    %v512 = vrot.slane %v511, 1
    %v513 = vadd.f32 %v511, %v512
    %v514 = vrot.slane %v507, 4
    %v515 = vadd.f32 %v507, %v514
    %v516 = vrot.slane %v515, 2
    %v517 = vadd.f32 %v515, %v516
    %v518 = vrot.slane %v517, 1
    %v519 = vadd.f32 %v517, %v518
    %v520 = vmul.f32 %v513, %v513
    %v521 = vmul.f32 %v519, %v519
    %v522 = vadd.f32 %v504, %v520
    %v523 = vadd.f32 %v505, %v521
    %v524 = vmul.f32 %v206, %v284
    %v525 = vmul.f32 %v207, %v285
    %v526 = vrot.slane %v524, 4
    %v527 = vadd.f32 %v524, %v526
    %v528 = vrot.slane %v527, 2
    %v529 = vadd.f32 %v527, %v528
    %v530 = vrot.slane %v529, 1
    %v531 = vadd.f32 %v529, %v530
    %v532 = vrot.slane %v525, 4
    %v533 = vadd.f32 %v525, %v532
    %v534 = vrot.slane %v533, 2
    %v535 = vadd.f32 %v533, %v534
    %v536 = vrot.slane %v535, 1
    %v537 = vadd.f32 %v535, %v536
    %v538 = vmul.f32 %v531, %v531
    %v539 = vmul.f32 %v537, %v537
    %v540 = vadd.f32 %v522, %v538
    %v541 = vadd.f32 %v523, %v539
    %v542 = vmul.f32 %v206, %v310
    %v543 = vmul.f32 %v207, %v311
    %v544 = vrot.slane %v542, 4
    %v545 = vadd.f32 %v542, %v544
    %v546 = vrot.slane %v545, 2
    %v547 = vadd.f32 %v545, %v546
    %v548 = vrot.slane %v547, 1
    %v549 = vadd.f32 %v547, %v548
    %v550 = vrot.slane %v543, 4
    %v551 = vadd.f32 %v543, %v550
    %v552 = vrot.slane %v551, 2
    %v553 = vadd.f32 %v551, %v552
    %v554 = vrot.slane %v553, 1
    %v555 = vadd.f32 %v553, %v554
    %v556 = vmul.f32 %v549, %v549
    %v557 = vmul.f32 %v555, %v555
    %v558 = vadd.f32 %v540, %v556
    %v559 = vadd.f32 %v541, %v557
    %v560 = vmul.f32 %v206, %v336
    %v561 = vmul.f32 %v207, %v337
    %v562 = vrot.slane %v560, 4
    %v563 = vadd.f32 %v560, %v562
    %v564 = vrot.slane %v563, 2
    %v565 = vadd.f32 %v563, %v564
    %v566 = vrot.slane %v565, 1
    %v567 = vadd.f32 %v565, %v566
    %v568 = vrot.slane %v561, 4
    %v569 = vadd.f32 %v561, %v568
    %v570 = vrot.slane %v569, 2
    %v571 = vadd.f32 %v569, %v570
    %v572 = vrot.slane %v571, 1
    %v573 = vadd.f32 %v571, %v572
    %v574 = vmul.f32 %v567, %v567
    %v575 = vmul.f32 %v573, %v573
    %v576 = vadd.f32 %v558, %v574
    %v577 = vadd.f32 %v559, %v575
    %v578 = vmul.f32 %v232, %v258
    %v579 = vmul.f32 %v233, %v259
    %v580 = vrot.slane %v578, 4
    %v581 = vadd.f32 %v578, %v580
    %v582 = vrot.slane %v581, 2
    %v583 = vadd.f32 %v581, %v582
    %v584 = vrot.slane %v583, 1
    %v585 = vadd.f32 %v583, %v584
    %v586 = vrot.slane %v579, 4
    %v587 = vadd.f32 %v579, %v586
    %v588 = vrot.slane %v587, 2
    %v589 = vadd.f32 %v587, %v588
    %v590 = vrot.slane %v589, 1
    %v591 = vadd.f32 %v589, %v590
    %v592 = vmul.f32 %v585, %v585
    %v593 = vmul.f32 %v591, %v591
    %v594 = vadd.f32 %v576, %v592
    %v595 = vadd.f32 %v577, %v593
    %v596 = vmul.f32 %v232, %v284
    %v597 = vmul.f32 %v233, %v285
    %v598 = vrot.slane %v596, 4
    %v599 = vadd.f32 %v596, %v598
    %v600 = vrot.slane %v599, 2
    %v601 = vadd.f32 %v599, %v600
    %v602 = vrot.slane %v601, 1
    %v603 = vadd.f32 %v601, %v602
    %v604 = vrot.slane %v597, 4
    %v605 = vadd.f32 %v597, %v604
    %v606 = vrot.slane %v605, 2
    %v607 = vadd.f32 %v605, %v606
    %v608 = vrot.slane %v607, 1
    %v609 = vadd.f32 %v607, %v608
    %v610 = vmul.f32 %v603, %v603
    %v611 = vmul.f32 %v609, %v609
    %v612 = vadd.f32 %v594, %v610
    %v613 = vadd.f32 %v595, %v611
    %v614 = vmul.f32 %v232, %v310
    %v615 = vmul.f32 %v233, %v311
    %v616 = vrot.slane %v614, 4
    %v617 = vadd.f32 %v614, %v616
    %v618 = vrot.slane %v617, 2
    %v619 = vadd.f32 %v617, %v618
    %v620 = vrot.slane %v619, 1
    %v621 = vadd.f32 %v619, %v620
    %v622 = vrot.slane %v615, 4
    %v623 = vadd.f32 %v615, %v622
    %v624 = vrot.slane %v623, 2
    %v625 = vadd.f32 %v623, %v624
    %v626 = vrot.slane %v625, 1
    %v627 = vadd.f32 %v625, %v626
    %v628 = vmul.f32 %v621, %v621
    %v629 = vmul.f32 %v627, %v627
    %v630 = vadd.f32 %v612, %v628
    %v631 = vadd.f32 %v613, %v629
    %v632 = vmul.f32 %v232, %v336
    %v633 = vmul.f32 %v233, %v337
    %v634 = vrot.slane %v632, 4
    %v635 = vadd.f32 %v632, %v634
    %v636 = vrot.slane %v635, 2
    %v637 = vadd.f32 %v635, %v636
    %v638 = vrot.slane %v637, 1
    %v639 = vadd.f32 %v637, %v638
    %v640 = vrot.slane %v633, 4
    %v641 = vadd.f32 %v633, %v640
    %v642 = vrot.slane %v641, 2
    %v643 = vadd.f32 %v641, %v642
    %v644 = vrot.slane %v643, 1
    %v645 = vadd.f32 %v643, %v644
    %v646 = vmul.f32 %v639, %v639
    %v647 = vmul.f32 %v645, %v645
    %v648 = vadd.f32 %v630, %v646
    %v649 = vadd.f32 %v631, %v647
    %v650 = vmul.f32 %v258, %v284
    %v651 = vmul.f32 %v259, %v285
    %v652 = vrot.slane %v650, 4
    %v653 = vadd.f32 %v650, %v652
    %v654 = vrot.slane %v653, 2
    %v655 = vadd.f32 %v653, %v654
    %v656 = vrot.slane %v655, 1
    %v657 = vadd.f32 %v655, %v656
    %v658 = vrot.slane %v651, 4
    %v659 = vadd.f32 %v651, %v658
    %v660 = vrot.slane %v659, 2
    %v661 = vadd.f32 %v659, %v660
    %v662 = vrot.slane %v661, 1
    %v663 = vadd.f32 %v661, %v662
    %v664 = vmul.f32 %v657, %v657
    %v665 = vmul.f32 %v663, %v663
    %v666 = vadd.f32 %v648, %v664
    %v667 = vadd.f32 %v649, %v665
    %v668 = vmul.f32 %v258, %v310
    %v669 = vmul.f32 %v259, %v311
    %v670 = vrot.slane %v668, 4
    %v671 = vadd.f32 %v668, %v670
    %v672 = vrot.slane %v671, 2
    %v673 = vadd.f32 %v671, %v672
    %v674 = vrot.slane %v673, 1
    %v675 = vadd.f32 %v673, %v674
    %v676 = vrot.slane %v669, 4
    %v677 = vadd.f32 %v669, %v676
    %v678 = vrot.slane %v677, 2
    %v679 = vadd.f32 %v677, %v678
    %v680 = vrot.slane %v679, 1
    %v681 = vadd.f32 %v679, %v680
    %v682 = vmul.f32 %v675, %v675
    %v683 = vmul.f32 %v681, %v681
    %v684 = vadd.f32 %v666, %v682
    %v685 = vadd.f32 %v667, %v683
    %v686 = vmul.f32 %v258, %v336
    %v687 = vmul.f32 %v259, %v337
    %v688 = vrot.slane %v686, 4
    %v689 = vadd.f32 %v686, %v688
    %v690 = vrot.slane %v689, 2
    %v691 = vadd.f32 %v689, %v690
    %v692 = vrot.slane %v691, 1
    %v693 = vadd.f32 %v691, %v692
    %v694 = vrot.slane %v687, 4
    %v695 = vadd.f32 %v687, %v694
    %v696 = vrot.slane %v695, 2
    %v697 = vadd.f32 %v695, %v696
    %v698 = vrot.slane %v697, 1
    %v699 = vadd.f32 %v697, %v698
    %v700 = vmul.f32 %v693, %v693
    %v701 = vmul.f32 %v699, %v699
    %v702 = vadd.f32 %v684, %v700
    %v703 = vadd.f32 %v685, %v701
    %v704 = vmul.f32 %v284, %v310
    %v705 = vmul.f32 %v285, %v311
    %v706 = vrot.slane %v704, 4
    %v707 = vadd.f32 %v704, %v706
    %v708 = vrot.slane %v707, 2
    %v709 = vadd.f32 %v707, %v708
    %v710 = vrot.slane %v709, 1
    %v711 = vadd.f32 %v709, %v710
    %v712 = vrot.slane %v705, 4
    %v713 = vadd.f32 %v705, %v712
    %v714 = vrot.slane %v713, 2
    %v715 = vadd.f32 %v713, %v714
    %v716 = vrot.slane %v715, 1
    %v717 = vadd.f32 %v715, %v716
    %v718 = vmul.f32 %v711, %v711
    %v719 = vmul.f32 %v717, %v717
    %v720 = vadd.f32 %v702, %v718
    %v721 = vadd.f32 %v703, %v719
    %v722 = vmul.f32 %v284, %v336
    %v723 = vmul.f32 %v285, %v337
    %v724 = vrot.slane %v722, 4
    %v725 = vadd.f32 %v722, %v724
    %v726 = vrot.slane %v725, 2
    %v727 = vadd.f32 %v725, %v726
    %v728 = vrot.slane %v727, 1
    %v729 = vadd.f32 %v727, %v728
    %v730 = vrot.slane %v723, 4
    %v731 = vadd.f32 %v723, %v730
    %v732 = vrot.slane %v731, 2
    %v733 = vadd.f32 %v731, %v732
    %v734 = vrot.slane %v733, 1
    %v735 = vadd.f32 %v733, %v734
    %v736 = vmul.f32 %v729, %v729
    %v737 = vmul.f32 %v735, %v735
    %v738 = vadd.f32 %v720, %v736
    %v739 = vadd.f32 %v721, %v737
    %v740 = vmul.f32 %v310, %v336
    %v741 = vmul.f32 %v311, %v337
    %v742 = vrot.slane %v740, 4
    %v743 = vadd.f32 %v740, %v742
    %v744 = vrot.slane %v743, 2
    %v745 = vadd.f32 %v743, %v744
    %v746 = vrot.slane %v745, 1
    %v747 = vadd.f32 %v745, %v746
    %v748 = vrot.slane %v741, 4
    %v749 = vadd.f32 %v741, %v748
    %v750 = vrot.slane %v749, 2
    %v751 = vadd.f32 %v749, %v750
    %v752 = vrot.slane %v751, 1
    %v753 = vadd.f32 %v751, %v752
    %v754 = vmul.f32 %v747, %v747
    %v755 = vmul.f32 %v753, %v753
    %v756 = vadd.f32 %v738, %v754
    %v757 = vadd.f32 %v739, %v755
    %v758 = vld [vmem:[#allocation3] sm:$0x3]
    %v759 = vmul.f32 %v756, 2.0
    %v760 = vmul.f32 %v757, 2.0
    %v763 = vrot.slane %v760, 7
    %vm764 = vcmask 1040384
    %v765 = vsel %vm764, %v759, %v763
    %v767 = vadd.f32 %v758, %v765
    %v768 = vlaneseq
    %vm769 = vcmp.ge.s32.totalorder %v768, 0
    %vm770 = vcmp.lt.s32.totalorder %v768, 256
    %vm771 = vmand %vm769, %vm770
    %772 = vst.msk [vmem:[#allocation3] sm:$0x3] %vm771, %v767
    %v773 = vmul.f32 %v206, %v79
    %v774 = vmul.f32 %v207, %v80
    %v775 = vrot.slane %v773, 4
    %v776 = vadd.f32 %v773, %v775
    %v777 = vrot.slane %v776, 2
    %v778 = vadd.f32 %v776, %v777
    %v779 = vrot.slane %v778, 1
    %v780 = vadd.f32 %v778, %v779
    %v781 = vrot.slane %v774, 4
    %v782 = vadd.f32 %v774, %v781
    %v783 = vrot.slane %v782, 2
    %v784 = vadd.f32 %v782, %v783
    %v785 = vrot.slane %v784, 1
    %v786 = vadd.f32 %v784, %v785
    %v787 = vadd.f32 %v780, %v413
    %v788 = vadd.f32 %v786, %v419
    %v791 = vrot.slane %v419, 4
    %vm792 = vcmask 1043456
    %v793 = vsel %vm792, %v413, %v791
    %v797 = vrot.slane %v788, 4
    %v798 = vsel %vm792, %v787, %v797
    %v800 = vsel %vm176, %v793, %v798
    %v801 = vmul.f32 %v232, %v79
    %v802 = vmul.f32 %v233, %v80
    %v803 = vrot.slane %v801, 4
    %v804 = vadd.f32 %v801, %v803
    %v805 = vrot.slane %v804, 2
    %v806 = vadd.f32 %v804, %v805
    %v807 = vrot.slane %v806, 1
    %v808 = vadd.f32 %v806, %v807
    %v809 = vrot.slane %v802, 4
    %v810 = vadd.f32 %v802, %v809
    %v811 = vrot.slane %v810, 2
    %v812 = vadd.f32 %v810, %v811
    %v813 = vrot.slane %v812, 1
    %v814 = vadd.f32 %v812, %v813
    %v815 = vadd.f32 %v808, %v427
    %v816 = vadd.f32 %v814, %v433
    %v819 = vrot.slane %v433, 4
    %v820 = vsel %vm792, %v427, %v819
    %v824 = vrot.slane %v816, 4
    %v825 = vsel %vm792, %v815, %v824
    %v827 = vsel %vm177, %v820, %v825
    %v828 = vmul.f32 %v258, %v79
    %v829 = vmul.f32 %v259, %v80
    %v830 = vrot.slane %v828, 4
    %v831 = vadd.f32 %v828, %v830
    %v832 = vrot.slane %v831, 2
    %v833 = vadd.f32 %v831, %v832
    %v834 = vrot.slane %v833, 1
    %v835 = vadd.f32 %v833, %v834
    %v836 = vrot.slane %v829, 4
    %v837 = vadd.f32 %v829, %v836
    %v838 = vrot.slane %v837, 2
    %v839 = vadd.f32 %v837, %v838
    %v840 = vrot.slane %v839, 1
    %v841 = vadd.f32 %v839, %v840
    %v842 = vadd.f32 %v835, %v441
    %v843 = vadd.f32 %v841, %v447
    %v846 = vrot.slane %v447, 4
    %v847 = vsel %vm792, %v441, %v846
    %v851 = vrot.slane %v843, 4
    %v852 = vsel %vm792, %v842, %v851
    %v854 = vsel %vm178, %v847, %v852
    %v855 = vmul.f32 %v284, %v79
    %v856 = vmul.f32 %v285, %v80
    %v857 = vrot.slane %v855, 4
    %v858 = vadd.f32 %v855, %v857
    %v859 = vrot.slane %v858, 2
    %v860 = vadd.f32 %v858, %v859
    %v861 = vrot.slane %v860, 1
    %v862 = vadd.f32 %v860, %v861
    %v863 = vrot.slane %v856, 4
    %v864 = vadd.f32 %v856, %v863
    %v865 = vrot.slane %v864, 2
    %v866 = vadd.f32 %v864, %v865
    %v867 = vrot.slane %v866, 1
    %v868 = vadd.f32 %v866, %v867
    %v869 = vadd.f32 %v862, %v455
    %v870 = vadd.f32 %v868, %v461
    %v873 = vrot.slane %v461, 4
    %v874 = vsel %vm792, %v455, %v873
    %v878 = vrot.slane %v870, 4
    %v879 = vsel %vm792, %v869, %v878
    %v881 = vsel %vm179, %v874, %v879
    %v882 = vmul.f32 %v310, %v79
    %v883 = vmul.f32 %v311, %v80
    %v884 = vrot.slane %v882, 4
    %v885 = vadd.f32 %v882, %v884
    %v886 = vrot.slane %v885, 2
    %v887 = vadd.f32 %v885, %v886
    %v888 = vrot.slane %v887, 1
    %v889 = vadd.f32 %v887, %v888
    %v890 = vrot.slane %v883, 4
    %v891 = vadd.f32 %v883, %v890
    %v892 = vrot.slane %v891, 2
    %v893 = vadd.f32 %v891, %v892
    %v894 = vrot.slane %v893, 1
    %v895 = vadd.f32 %v893, %v894
    %v896 = vadd.f32 %v889, %v469
    %v897 = vadd.f32 %v895, %v475
    %v900 = vrot.slane %v475, 4
    %v901 = vsel %vm792, %v469, %v900
    %v905 = vrot.slane %v897, 4
    %v906 = vsel %vm792, %v896, %v905
    %v908 = vsel %vm180, %v901, %v906
    %v909 = vmul.f32 %v336, %v79
    %v910 = vmul.f32 %v337, %v80
    %v911 = vrot.slane %v909, 4
    %v912 = vadd.f32 %v909, %v911
    %v913 = vrot.slane %v912, 2
    %v914 = vadd.f32 %v912, %v913
    %v915 = vrot.slane %v914, 1
    %v916 = vadd.f32 %v914, %v915
    %v917 = vrot.slane %v910, 4
    %v918 = vadd.f32 %v910, %v917
    %v919 = vrot.slane %v918, 2
    %v920 = vadd.f32 %v918, %v919
    %v921 = vrot.slane %v920, 1
    %v922 = vadd.f32 %v920, %v921
    %v923 = vadd.f32 %v916, %v483
    %v924 = vadd.f32 %v922, %v489
    %v927 = vrot.slane %v489, 4
    %v928 = vsel %vm792, %v483, %v927
    %v932 = vrot.slane %v924, 4
    %v933 = vsel %vm792, %v923, %v932
    %v935 = vsel %vm181, %v928, %v933
    %v936 = vmax.f32 %v800, %v827
    %v937 = vmax.f32 %v936, %v854
    %v938 = vmax.f32 %v937, %v881
    %v939 = vmax.f32 %v938, %v908
    %v940 = vmax.f32 %v939, %v935
    %v941 = vsub.f32 %v800, %v940
    %v942 = vmul.f32 %v941, 1.442695
    %v943 = vpow.pop %v942
    %v944 = vsub.f32 %v827, %v940
    %v945 = vmul.f32 %v944, 1.442695
    %v946 = vpow.pop %v945
    %v947 = vsub.f32 %v854, %v940
    %v948 = vmul.f32 %v947, 1.442695
    %v949 = vpow.pop %v948
    %v950 = vsub.f32 %v881, %v940
    %v951 = vmul.f32 %v950, 1.442695
    %v952 = vpow.pop %v951
    %v953 = vsub.f32 %v908, %v940
    %v954 = vmul.f32 %v953, 1.442695
    %v955 = vpow.pop %v954
    %v956 = vsub.f32 %v935, %v940
    %v957 = vmul.f32 %v956, 1.442695
    %v958 = vpow.pop %v957
    %v959 = vadd.f32 %v943, %v946
    %v960 = vadd.f32 %v959, %v949
    %v961 = vadd.f32 %v960, %v952
    %v962 = vadd.f32 %v961, %v955
    %v963 = vadd.f32 %v962, %v958
    %v964 = vrcp.pop %v963
    %v965 = vmul.f32 %v963, %v964
    %v966 = vsub.f32 1.0, %v965
    %v967 = vmul.f32 %v964, %v966
    %v968 = vadd.f32 %v964, %v967
    %vm969 = vweird.f32 %v963
    %vm970 = vweird.f32 %v964
    %vm971 = vmor %vm969, %vm970
    %v972 = vsel %vm971, %v964, %v968
    %v973 = vand.u32 2147483647, %v963
    %vm974 = vcmp.eq.f32.partialorder %v973, 8.507059e+37
    %v975 = vand.u32 %v963, 2147483648
    %v976 = vor.u32 1.1754944e-38, %v975
    %v977 = vsel %vm974, %v976, %v972
    %v978 = vmul.f32 %v943, %v977
    %v979 = vsub.f32 %v978, 0.16666667
    %v980 = vsel %vm176, 0.0, %v979
    %v981 = vmul.f32 %v980, %v980
    %v982 = vmul.f32 %v946, %v977
    %v983 = vsub.f32 %v982, 0.16666667
    %v984 = vsel %vm177, 0.0, %v983
    %v985 = vmul.f32 %v984, %v984
    %v986 = vadd.f32 %v981, %v985
    %v987 = vmul.f32 %v949, %v977
    %v988 = vsub.f32 %v987, 0.16666667
    %v989 = vsel %vm178, 0.0, %v988
    %v990 = vmul.f32 %v989, %v989
    %v991 = vadd.f32 %v986, %v990
    %v992 = vmul.f32 %v952, %v977
    %v993 = vsub.f32 %v992, 0.16666667
    %v994 = vsel %vm179, 0.0, %v993
    %v995 = vmul.f32 %v994, %v994
    %v996 = vadd.f32 %v991, %v995
    %v997 = vmul.f32 %v955, %v977
    %v998 = vsub.f32 %v997, 0.16666667
    %v999 = vsel %vm180, 0.0, %v998
    %v1000 = vmul.f32 %v999, %v999
    %v1001 = vadd.f32 %v996, %v1000
    %v1002 = vmul.f32 %v958, %v977
    %v1003 = vsub.f32 %v1002, 0.16666667
    %v1004 = vsel %vm181, 0.0, %v1003
    %v1005 = vmul.f32 %v1004, %v1004
    %v1006 = vadd.f32 %v1001, %v1005
    %v1007 = vmul.f32 %v206, %v81
    %v1008 = vmul.f32 %v207, %v82
    %v1009 = vrot.slane %v1007, 4
    %v1010 = vadd.f32 %v1007, %v1009
    %v1011 = vrot.slane %v1010, 2
    %v1012 = vadd.f32 %v1010, %v1011
    %v1013 = vrot.slane %v1012, 1
    %v1014 = vadd.f32 %v1012, %v1013
    %v1015 = vrot.slane %v1008, 4
    %v1016 = vadd.f32 %v1008, %v1015
    %v1017 = vrot.slane %v1016, 2
    %v1018 = vadd.f32 %v1016, %v1017
    %v1019 = vrot.slane %v1018, 1
    %v1020 = vadd.f32 %v1018, %v1019
    %v1021 = vadd.f32 %v1014, %v413
    %v1022 = vadd.f32 %v1020, %v419
    %v1023 = vrot.slane %v793, 7
    %v1027 = vrot.slane %v1022, 4
    %v1028 = vsel %vm792, %v1021, %v1027
    %v1029 = vrot.slane %v1028, 7
    %v1031 = vsel %vm176, %v1023, %v1029
    %v1032 = vmul.f32 %v232, %v81
    %v1033 = vmul.f32 %v233, %v82
    %v1034 = vrot.slane %v1032, 4
    %v1035 = vadd.f32 %v1032, %v1034
    %v1036 = vrot.slane %v1035, 2
    %v1037 = vadd.f32 %v1035, %v1036
    %v1038 = vrot.slane %v1037, 1
    %v1039 = vadd.f32 %v1037, %v1038
    %v1040 = vrot.slane %v1033, 4
    %v1041 = vadd.f32 %v1033, %v1040
    %v1042 = vrot.slane %v1041, 2
    %v1043 = vadd.f32 %v1041, %v1042
    %v1044 = vrot.slane %v1043, 1
    %v1045 = vadd.f32 %v1043, %v1044
    %v1046 = vadd.f32 %v1039, %v427
    %v1047 = vadd.f32 %v1045, %v433
    %v1048 = vrot.slane %v820, 7
    %v1052 = vrot.slane %v1047, 4
    %v1053 = vsel %vm792, %v1046, %v1052
    %v1054 = vrot.slane %v1053, 7
    %v1056 = vsel %vm177, %v1048, %v1054
    %v1057 = vmul.f32 %v258, %v81
    %v1058 = vmul.f32 %v259, %v82
    %v1059 = vrot.slane %v1057, 4
    %v1060 = vadd.f32 %v1057, %v1059
    %v1061 = vrot.slane %v1060, 2
    %v1062 = vadd.f32 %v1060, %v1061
    %v1063 = vrot.slane %v1062, 1
    %v1064 = vadd.f32 %v1062, %v1063
    %v1065 = vrot.slane %v1058, 4
    %v1066 = vadd.f32 %v1058, %v1065
    %v1067 = vrot.slane %v1066, 2
    %v1068 = vadd.f32 %v1066, %v1067
    %v1069 = vrot.slane %v1068, 1
    %v1070 = vadd.f32 %v1068, %v1069
    %v1071 = vadd.f32 %v1064, %v441
    %v1072 = vadd.f32 %v1070, %v447
    %v1073 = vrot.slane %v847, 7
    %v1077 = vrot.slane %v1072, 4
    %v1078 = vsel %vm792, %v1071, %v1077
    %v1079 = vrot.slane %v1078, 7
    %v1081 = vsel %vm178, %v1073, %v1079
    %v1082 = vmul.f32 %v284, %v81
    %v1083 = vmul.f32 %v285, %v82
    %v1084 = vrot.slane %v1082, 4
    %v1085 = vadd.f32 %v1082, %v1084
    %v1086 = vrot.slane %v1085, 2
    %v1087 = vadd.f32 %v1085, %v1086
    %v1088 = vrot.slane %v1087, 1
    %v1089 = vadd.f32 %v1087, %v1088
    %v1090 = vrot.slane %v1083, 4
    %v1091 = vadd.f32 %v1083, %v1090
    %v1092 = vrot.slane %v1091, 2
    %v1093 = vadd.f32 %v1091, %v1092
    %v1094 = vrot.slane %v1093, 1
    %v1095 = vadd.f32 %v1093, %v1094
    %v1096 = vadd.f32 %v1089, %v455
    %v1097 = vadd.f32 %v1095, %v461
    %v1098 = vrot.slane %v874, 7
    %v1102 = vrot.slane %v1097, 4
    %v1103 = vsel %vm792, %v1096, %v1102
    %v1104 = vrot.slane %v1103, 7
    %v1106 = vsel %vm179, %v1098, %v1104
    %v1107 = vmul.f32 %v310, %v81
    %v1108 = vmul.f32 %v311, %v82
    %v1109 = vrot.slane %v1107, 4
    %v1110 = vadd.f32 %v1107, %v1109
    %v1111 = vrot.slane %v1110, 2
    %v1112 = vadd.f32 %v1110, %v1111
    %v1113 = vrot.slane %v1112, 1
    %v1114 = vadd.f32 %v1112, %v1113
    %v1115 = vrot.slane %v1108, 4
    %v1116 = vadd.f32 %v1108, %v1115
    %v1117 = vrot.slane %v1116, 2
    %v1118 = vadd.f32 %v1116, %v1117
    %v1119 = vrot.slane %v1118, 1
    %v1120 = vadd.f32 %v1118, %v1119
    %v1121 = vadd.f32 %v1114, %v469
    %v1122 = vadd.f32 %v1120, %v475
    %v1123 = vrot.slane %v901, 7
    %v1127 = vrot.slane %v1122, 4
    %v1128 = vsel %vm792, %v1121, %v1127
    %v1129 = vrot.slane %v1128, 7
    %v1131 = vsel %vm180, %v1123, %v1129
    %v1132 = vmul.f32 %v336, %v81
    %v1133 = vmul.f32 %v337, %v82
    %v1134 = vrot.slane %v1132, 4
    %v1135 = vadd.f32 %v1132, %v1134
    %v1136 = vrot.slane %v1135, 2
    %v1137 = vadd.f32 %v1135, %v1136
    %v1138 = vrot.slane %v1137, 1
    %v1139 = vadd.f32 %v1137, %v1138
    %v1140 = vrot.slane %v1133, 4
    %v1141 = vadd.f32 %v1133, %v1140
    %v1142 = vrot.slane %v1141, 2
    %v1143 = vadd.f32 %v1141, %v1142
    %v1144 = vrot.slane %v1143, 1
    %v1145 = vadd.f32 %v1143, %v1144
    %v1146 = vadd.f32 %v1139, %v483
    %v1147 = vadd.f32 %v1145, %v489
    %v1148 = vrot.slane %v928, 7
    %v1152 = vrot.slane %v1147, 4
    %v1153 = vsel %vm792, %v1146, %v1152
    %v1154 = vrot.slane %v1153, 7
    %v1156 = vsel %vm181, %v1148, %v1154
    %v1157 = vmax.f32 %v1031, %v1056
    %v1158 = vmax.f32 %v1157, %v1081
    %v1159 = vmax.f32 %v1158, %v1106
    %v1160 = vmax.f32 %v1159, %v1131
    %v1161 = vmax.f32 %v1160, %v1156
    %v1162 = vsub.f32 %v1031, %v1161
    %v1163 = vmul.f32 %v1162, 1.442695
    %v1164 = vpow.pop %v1163
    %v1165 = vsub.f32 %v1056, %v1161
    %v1166 = vmul.f32 %v1165, 1.442695
    %v1167 = vpow.pop %v1166
    %v1168 = vsub.f32 %v1081, %v1161
    %v1169 = vmul.f32 %v1168, 1.442695
    %v1170 = vpow.pop %v1169
    %v1171 = vsub.f32 %v1106, %v1161
    %v1172 = vmul.f32 %v1171, 1.442695
    %v1173 = vpow.pop %v1172
    %v1174 = vsub.f32 %v1131, %v1161
    %v1175 = vmul.f32 %v1174, 1.442695
    %v1176 = vpow.pop %v1175
    %v1177 = vsub.f32 %v1156, %v1161
    %v1178 = vmul.f32 %v1177, 1.442695
    %v1179 = vpow.pop %v1178
    %v1180 = vadd.f32 %v1164, %v1167
    %v1181 = vadd.f32 %v1180, %v1170
    %v1182 = vadd.f32 %v1181, %v1173
    %v1183 = vadd.f32 %v1182, %v1176
    %v1184 = vadd.f32 %v1183, %v1179
    %v1185 = vrcp.pop %v1184
    %v1186 = vmul.f32 %v1184, %v1185
    %v1187 = vsub.f32 1.0, %v1186
    %v1188 = vmul.f32 %v1185, %v1187
    %v1189 = vadd.f32 %v1185, %v1188
    %vm1190 = vweird.f32 %v1184
    %vm1191 = vweird.f32 %v1185
    %vm1192 = vmor %vm1190, %vm1191
    %v1193 = vsel %vm1192, %v1185, %v1189
    %v1194 = vand.u32 2147483647, %v1184
    %vm1195 = vcmp.eq.f32.partialorder %v1194, 8.507059e+37
    %v1196 = vand.u32 %v1184, 2147483648
    %v1197 = vor.u32 1.1754944e-38, %v1196
    %v1198 = vsel %vm1195, %v1197, %v1193
    %v1199 = vmul.f32 %v1164, %v1198
    %v1200 = vsub.f32 %v1199, 0.16666667
    %v1201 = vsel %vm176, 0.0, %v1200
    %v1202 = vmul.f32 %v1201, %v1201
    %v1204 = vrot.slane %v1202, 5
    %v1205 = vrot.slane %v1204, 4
    %v1207 = vadd.f32 %v1006, %v1205
    %v1208 = vmul.f32 %v1167, %v1198
    %v1209 = vsub.f32 %v1208, 0.16666667
    %v1210 = vsel %vm177, 0.0, %v1209
    %v1211 = vmul.f32 %v1210, %v1210
    %v1213 = vrot.slane %v1211, 5
    %v1214 = vrot.slane %v1213, 4
    %v1216 = vadd.f32 %v1207, %v1214
    %v1217 = vmul.f32 %v1170, %v1198
    %v1218 = vsub.f32 %v1217, 0.16666667
    %v1219 = vsel %vm178, 0.0, %v1218
    %v1220 = vmul.f32 %v1219, %v1219
    %v1222 = vrot.slane %v1220, 5
    %v1223 = vrot.slane %v1222, 4
    %v1225 = vadd.f32 %v1216, %v1223
    %v1226 = vmul.f32 %v1173, %v1198
    %v1227 = vsub.f32 %v1226, 0.16666667
    %v1228 = vsel %vm179, 0.0, %v1227
    %v1229 = vmul.f32 %v1228, %v1228
    %v1231 = vrot.slane %v1229, 5
    %v1232 = vrot.slane %v1231, 4
    %v1234 = vadd.f32 %v1225, %v1232
    %v1235 = vmul.f32 %v1176, %v1198
    %v1236 = vsub.f32 %v1235, 0.16666667
    %v1237 = vsel %vm180, 0.0, %v1236
    %v1238 = vmul.f32 %v1237, %v1237
    %v1240 = vrot.slane %v1238, 5
    %v1241 = vrot.slane %v1240, 4
    %v1243 = vadd.f32 %v1234, %v1241
    %v1244 = vmul.f32 %v1179, %v1198
    %v1245 = vsub.f32 %v1244, 0.16666667
    %v1246 = vsel %vm181, 0.0, %v1245
    %v1247 = vmul.f32 %v1246, %v1246
    %v1249 = vrot.slane %v1247, 5
    %v1250 = vrot.slane %v1249, 4
    %v1252 = vadd.f32 %v1243, %v1250
    %v1253 = vmul.f32 %v206, %v83
    %v1254 = vmul.f32 %v207, %v84
    %v1255 = vrot.slane %v1253, 4
    %v1256 = vadd.f32 %v1253, %v1255
    %v1257 = vrot.slane %v1256, 2
    %v1258 = vadd.f32 %v1256, %v1257
    %v1259 = vrot.slane %v1258, 1
    %v1260 = vadd.f32 %v1258, %v1259
    %v1261 = vrot.slane %v1254, 4
    %v1262 = vadd.f32 %v1254, %v1261
    %v1263 = vrot.slane %v1262, 2
    %v1264 = vadd.f32 %v1262, %v1263
    %v1265 = vrot.slane %v1264, 1
    %v1266 = vadd.f32 %v1264, %v1265
    %v1267 = vadd.f32 %v1260, %v413
    %v1268 = vadd.f32 %v1266, %v419
    %v1269 = vrot.slane %v793, 6
    %v1273 = vrot.slane %v1268, 4
    %v1274 = vsel %vm792, %v1267, %v1273
    %v1275 = vrot.slane %v1274, 6
    %v1277 = vsel %vm176, %v1269, %v1275
    %v1278 = vmul.f32 %v232, %v83
    %v1279 = vmul.f32 %v233, %v84
    %v1280 = vrot.slane %v1278, 4
    %v1281 = vadd.f32 %v1278, %v1280
    %v1282 = vrot.slane %v1281, 2
    %v1283 = vadd.f32 %v1281, %v1282
    %v1284 = vrot.slane %v1283, 1
    %v1285 = vadd.f32 %v1283, %v1284
    %v1286 = vrot.slane %v1279, 4
    %v1287 = vadd.f32 %v1279, %v1286
    %v1288 = vrot.slane %v1287, 2
    %v1289 = vadd.f32 %v1287, %v1288
    %v1290 = vrot.slane %v1289, 1
    %v1291 = vadd.f32 %v1289, %v1290
    %v1292 = vadd.f32 %v1285, %v427
    %v1293 = vadd.f32 %v1291, %v433
    %v1294 = vrot.slane %v820, 6
    %v1298 = vrot.slane %v1293, 4
    %v1299 = vsel %vm792, %v1292, %v1298
    %v1300 = vrot.slane %v1299, 6
    %v1302 = vsel %vm177, %v1294, %v1300
    %v1303 = vmul.f32 %v258, %v83
    %v1304 = vmul.f32 %v259, %v84
    %v1305 = vrot.slane %v1303, 4
    %v1306 = vadd.f32 %v1303, %v1305
    %v1307 = vrot.slane %v1306, 2
    %v1308 = vadd.f32 %v1306, %v1307
    %v1309 = vrot.slane %v1308, 1
    %v1310 = vadd.f32 %v1308, %v1309
    %v1311 = vrot.slane %v1304, 4
    %v1312 = vadd.f32 %v1304, %v1311
    %v1313 = vrot.slane %v1312, 2
    %v1314 = vadd.f32 %v1312, %v1313
    %v1315 = vrot.slane %v1314, 1
    %v1316 = vadd.f32 %v1314, %v1315
    %v1317 = vadd.f32 %v1310, %v441
    %v1318 = vadd.f32 %v1316, %v447
    %v1319 = vrot.slane %v847, 6
    %v1323 = vrot.slane %v1318, 4
    %v1324 = vsel %vm792, %v1317, %v1323
    %v1325 = vrot.slane %v1324, 6
    %v1327 = vsel %vm178, %v1319, %v1325
    %v1328 = vmul.f32 %v284, %v83
    %v1329 = vmul.f32 %v285, %v84
    %v1330 = vrot.slane %v1328, 4
    %v1331 = vadd.f32 %v1328, %v1330
    %v1332 = vrot.slane %v1331, 2
    %v1333 = vadd.f32 %v1331, %v1332
    %v1334 = vrot.slane %v1333, 1
    %v1335 = vadd.f32 %v1333, %v1334
    %v1336 = vrot.slane %v1329, 4
    %v1337 = vadd.f32 %v1329, %v1336
    %v1338 = vrot.slane %v1337, 2
    %v1339 = vadd.f32 %v1337, %v1338
    %v1340 = vrot.slane %v1339, 1
    %v1341 = vadd.f32 %v1339, %v1340
    %v1342 = vadd.f32 %v1335, %v455
    %v1343 = vadd.f32 %v1341, %v461
    %v1344 = vrot.slane %v874, 6
    %v1348 = vrot.slane %v1343, 4
    %v1349 = vsel %vm792, %v1342, %v1348
    %v1350 = vrot.slane %v1349, 6
    %v1352 = vsel %vm179, %v1344, %v1350
    %v1353 = vmul.f32 %v310, %v83
    %v1354 = vmul.f32 %v311, %v84
    %v1355 = vrot.slane %v1353, 4
    %v1356 = vadd.f32 %v1353, %v1355
    %v1357 = vrot.slane %v1356, 2
    %v1358 = vadd.f32 %v1356, %v1357
    %v1359 = vrot.slane %v1358, 1
    %v1360 = vadd.f32 %v1358, %v1359
    %v1361 = vrot.slane %v1354, 4
    %v1362 = vadd.f32 %v1354, %v1361
    %v1363 = vrot.slane %v1362, 2
    %v1364 = vadd.f32 %v1362, %v1363
    %v1365 = vrot.slane %v1364, 1
    %v1366 = vadd.f32 %v1364, %v1365
    %v1367 = vadd.f32 %v1360, %v469
    %v1368 = vadd.f32 %v1366, %v475
    %v1369 = vrot.slane %v901, 6
    %v1373 = vrot.slane %v1368, 4
    %v1374 = vsel %vm792, %v1367, %v1373
    %v1375 = vrot.slane %v1374, 6
    %v1377 = vsel %vm180, %v1369, %v1375
    %v1378 = vmul.f32 %v336, %v83
    %v1379 = vmul.f32 %v337, %v84
    %v1380 = vrot.slane %v1378, 4
    %v1381 = vadd.f32 %v1378, %v1380
    %v1382 = vrot.slane %v1381, 2
    %v1383 = vadd.f32 %v1381, %v1382
    %v1384 = vrot.slane %v1383, 1
    %v1385 = vadd.f32 %v1383, %v1384
    %v1386 = vrot.slane %v1379, 4
    %v1387 = vadd.f32 %v1379, %v1386
    %v1388 = vrot.slane %v1387, 2
    %v1389 = vadd.f32 %v1387, %v1388
    %v1390 = vrot.slane %v1389, 1
    %v1391 = vadd.f32 %v1389, %v1390
    %v1392 = vadd.f32 %v1385, %v483
    %v1393 = vadd.f32 %v1391, %v489
    %v1394 = vrot.slane %v928, 6
    %v1398 = vrot.slane %v1393, 4
    %v1399 = vsel %vm792, %v1392, %v1398
    %v1400 = vrot.slane %v1399, 6
    %v1402 = vsel %vm181, %v1394, %v1400
    %v1403 = vmax.f32 %v1277, %v1302
    %v1404 = vmax.f32 %v1403, %v1327
    %v1405 = vmax.f32 %v1404, %v1352
    %v1406 = vmax.f32 %v1405, %v1377
    %v1407 = vmax.f32 %v1406, %v1402
    %v1408 = vsub.f32 %v1277, %v1407
    %v1409 = vmul.f32 %v1408, 1.442695
    %v1410 = vpow.pop %v1409
    %v1411 = vsub.f32 %v1302, %v1407
    %v1412 = vmul.f32 %v1411, 1.442695
    %v1413 = vpow.pop %v1412
    %v1414 = vsub.f32 %v1327, %v1407
    %v1415 = vmul.f32 %v1414, 1.442695
    %v1416 = vpow.pop %v1415
    %v1417 = vsub.f32 %v1352, %v1407
    %v1418 = vmul.f32 %v1417, 1.442695
    %v1419 = vpow.pop %v1418
    %v1420 = vsub.f32 %v1377, %v1407
    %v1421 = vmul.f32 %v1420, 1.442695
    %v1422 = vpow.pop %v1421
    %v1423 = vsub.f32 %v1402, %v1407
    %v1424 = vmul.f32 %v1423, 1.442695
    %v1425 = vpow.pop %v1424
    %v1426 = vadd.f32 %v1410, %v1413
    %v1427 = vadd.f32 %v1426, %v1416
    %v1428 = vadd.f32 %v1427, %v1419
    %v1429 = vadd.f32 %v1428, %v1422
    %v1430 = vadd.f32 %v1429, %v1425
    %v1431 = vrcp.pop %v1430
    %v1432 = vmul.f32 %v1430, %v1431
    %v1433 = vsub.f32 1.0, %v1432
    %v1434 = vmul.f32 %v1431, %v1433
    %v1435 = vadd.f32 %v1431, %v1434
    %vm1436 = vweird.f32 %v1430
    %vm1437 = vweird.f32 %v1431
    %vm1438 = vmor %vm1436, %vm1437
    %v1439 = vsel %vm1438, %v1431, %v1435
    %v1440 = vand.u32 2147483647, %v1430
    %vm1441 = vcmp.eq.f32.partialorder %v1440, 8.507059e+37
    %v1442 = vand.u32 %v1430, 2147483648
    %v1443 = vor.u32 1.1754944e-38, %v1442
    %v1444 = vsel %vm1441, %v1443, %v1439
    %v1445 = vmul.f32 %v1410, %v1444
    %v1446 = vsub.f32 %v1445, 0.16666667
    %v1447 = vsel %vm176, 0.0, %v1446
    %v1448 = vmul.f32 %v1447, %v1447
    %v1450 = vrot.slane %v1448, 6
    %v1451 = vrot.slane %v1450, 4
    %v1453 = vadd.f32 %v1252, %v1451
    %v1454 = vmul.f32 %v1413, %v1444
    %v1455 = vsub.f32 %v1454, 0.16666667
    %v1456 = vsel %vm177, 0.0, %v1455
    %v1457 = vmul.f32 %v1456, %v1456
    %v1459 = vrot.slane %v1457, 6
    %v1460 = vrot.slane %v1459, 4
    %v1462 = vadd.f32 %v1453, %v1460
    %v1463 = vmul.f32 %v1416, %v1444
    %v1464 = vsub.f32 %v1463, 0.16666667
    %v1465 = vsel %vm178, 0.0, %v1464
    %v1466 = vmul.f32 %v1465, %v1465
    %v1468 = vrot.slane %v1466, 6
    %v1469 = vrot.slane %v1468, 4
    %v1471 = vadd.f32 %v1462, %v1469
    %v1472 = vmul.f32 %v1419, %v1444
    %v1473 = vsub.f32 %v1472, 0.16666667
    %v1474 = vsel %vm179, 0.0, %v1473
    %v1475 = vmul.f32 %v1474, %v1474
    %v1477 = vrot.slane %v1475, 6
    %v1478 = vrot.slane %v1477, 4
    %v1480 = vadd.f32 %v1471, %v1478
    %v1481 = vmul.f32 %v1422, %v1444
    %v1482 = vsub.f32 %v1481, 0.16666667
    %v1483 = vsel %vm180, 0.0, %v1482
    %v1484 = vmul.f32 %v1483, %v1483
    %v1486 = vrot.slane %v1484, 6
    %v1487 = vrot.slane %v1486, 4
    %v1489 = vadd.f32 %v1480, %v1487
    %v1490 = vmul.f32 %v1425, %v1444
    %v1491 = vsub.f32 %v1490, 0.16666667
    %v1492 = vsel %vm181, 0.0, %v1491
    %v1493 = vmul.f32 %v1492, %v1492
    %v1495 = vrot.slane %v1493, 6
    %v1496 = vrot.slane %v1495, 4
    %v1498 = vadd.f32 %v1489, %v1496
    %v1499 = vmul.f32 %v206, %v85
    %v1500 = vmul.f32 %v207, %v86
    %v1501 = vrot.slane %v1499, 4
    %v1502 = vadd.f32 %v1499, %v1501
    %v1503 = vrot.slane %v1502, 2
    %v1504 = vadd.f32 %v1502, %v1503
    %v1505 = vrot.slane %v1504, 1
    %v1506 = vadd.f32 %v1504, %v1505
    %v1507 = vrot.slane %v1500, 4
    %v1508 = vadd.f32 %v1500, %v1507
    %v1509 = vrot.slane %v1508, 2
    %v1510 = vadd.f32 %v1508, %v1509
    %v1511 = vrot.slane %v1510, 1
    %v1512 = vadd.f32 %v1510, %v1511
    %v1513 = vadd.f32 %v1506, %v413
    %v1514 = vadd.f32 %v1512, %v419
    %v1515 = vrot.slane %v793, 5
    %v1519 = vrot.slane %v1514, 4
    %v1520 = vsel %vm792, %v1513, %v1519
    %v1521 = vrot.slane %v1520, 5
    %v1523 = vsel %vm176, %v1515, %v1521
    %v1524 = vmul.f32 %v232, %v85
    %v1525 = vmul.f32 %v233, %v86
    %v1526 = vrot.slane %v1524, 4
    %v1527 = vadd.f32 %v1524, %v1526
    %v1528 = vrot.slane %v1527, 2
    %v1529 = vadd.f32 %v1527, %v1528
    %v1530 = vrot.slane %v1529, 1
    %v1531 = vadd.f32 %v1529, %v1530
    %v1532 = vrot.slane %v1525, 4
    %v1533 = vadd.f32 %v1525, %v1532
    %v1534 = vrot.slane %v1533, 2
    %v1535 = vadd.f32 %v1533, %v1534
    %v1536 = vrot.slane %v1535, 1
    %v1537 = vadd.f32 %v1535, %v1536
    %v1538 = vadd.f32 %v1531, %v427
    %v1539 = vadd.f32 %v1537, %v433
    %v1540 = vrot.slane %v820, 5
    %v1544 = vrot.slane %v1539, 4
    %v1545 = vsel %vm792, %v1538, %v1544
    %v1546 = vrot.slane %v1545, 5
    %v1548 = vsel %vm177, %v1540, %v1546
    %v1549 = vmul.f32 %v258, %v85
    %v1550 = vmul.f32 %v259, %v86
    %v1551 = vrot.slane %v1549, 4
    %v1552 = vadd.f32 %v1549, %v1551
    %v1553 = vrot.slane %v1552, 2
    %v1554 = vadd.f32 %v1552, %v1553
    %v1555 = vrot.slane %v1554, 1
    %v1556 = vadd.f32 %v1554, %v1555
    %v1557 = vrot.slane %v1550, 4
    %v1558 = vadd.f32 %v1550, %v1557
    %v1559 = vrot.slane %v1558, 2
    %v1560 = vadd.f32 %v1558, %v1559
    %v1561 = vrot.slane %v1560, 1
    %v1562 = vadd.f32 %v1560, %v1561
    %v1563 = vadd.f32 %v1556, %v441
    %v1564 = vadd.f32 %v1562, %v447
    %v1565 = vrot.slane %v847, 5
    %v1569 = vrot.slane %v1564, 4
    %v1570 = vsel %vm792, %v1563, %v1569
    %v1571 = vrot.slane %v1570, 5
    %v1573 = vsel %vm178, %v1565, %v1571
    %v1574 = vmul.f32 %v284, %v85
    %v1575 = vmul.f32 %v285, %v86
    %v1576 = vrot.slane %v1574, 4
    %v1577 = vadd.f32 %v1574, %v1576
    %v1578 = vrot.slane %v1577, 2
    %v1579 = vadd.f32 %v1577, %v1578
    %v1580 = vrot.slane %v1579, 1
    %v1581 = vadd.f32 %v1579, %v1580
    %v1582 = vrot.slane %v1575, 4
    %v1583 = vadd.f32 %v1575, %v1582
    %v1584 = vrot.slane %v1583, 2
    %v1585 = vadd.f32 %v1583, %v1584
    %v1586 = vrot.slane %v1585, 1
    %v1587 = vadd.f32 %v1585, %v1586
    %v1588 = vadd.f32 %v1581, %v455
    %v1589 = vadd.f32 %v1587, %v461
    %v1590 = vrot.slane %v874, 5
    %v1594 = vrot.slane %v1589, 4
    %v1595 = vsel %vm792, %v1588, %v1594
    %v1596 = vrot.slane %v1595, 5
    %v1598 = vsel %vm179, %v1590, %v1596
    %v1599 = vmul.f32 %v310, %v85
    %v1600 = vmul.f32 %v311, %v86
    %v1601 = vrot.slane %v1599, 4
    %v1602 = vadd.f32 %v1599, %v1601
    %v1603 = vrot.slane %v1602, 2
    %v1604 = vadd.f32 %v1602, %v1603
    %v1605 = vrot.slane %v1604, 1
    %v1606 = vadd.f32 %v1604, %v1605
    %v1607 = vrot.slane %v1600, 4
    %v1608 = vadd.f32 %v1600, %v1607
    %v1609 = vrot.slane %v1608, 2
    %v1610 = vadd.f32 %v1608, %v1609
    %v1611 = vrot.slane %v1610, 1
    %v1612 = vadd.f32 %v1610, %v1611
    %v1613 = vadd.f32 %v1606, %v469
    %v1614 = vadd.f32 %v1612, %v475
    %v1615 = vrot.slane %v901, 5
    %v1619 = vrot.slane %v1614, 4
    %v1620 = vsel %vm792, %v1613, %v1619
    %v1621 = vrot.slane %v1620, 5
    %v1623 = vsel %vm180, %v1615, %v1621
    %v1624 = vmul.f32 %v336, %v85
    %v1625 = vmul.f32 %v337, %v86
    %v1626 = vrot.slane %v1624, 4
    %v1627 = vadd.f32 %v1624, %v1626
    %v1628 = vrot.slane %v1627, 2
    %v1629 = vadd.f32 %v1627, %v1628
    %v1630 = vrot.slane %v1629, 1
    %v1631 = vadd.f32 %v1629, %v1630
    %v1632 = vrot.slane %v1625, 4
    %v1633 = vadd.f32 %v1625, %v1632
    %v1634 = vrot.slane %v1633, 2
    %v1635 = vadd.f32 %v1633, %v1634
    %v1636 = vrot.slane %v1635, 1
    %v1637 = vadd.f32 %v1635, %v1636
    %v1638 = vadd.f32 %v1631, %v483
    %v1639 = vadd.f32 %v1637, %v489
    %v1640 = vrot.slane %v928, 5
    %v1644 = vrot.slane %v1639, 4
    %v1645 = vsel %vm792, %v1638, %v1644
    %v1646 = vrot.slane %v1645, 5
    %v1648 = vsel %vm181, %v1640, %v1646
    %v1649 = vmax.f32 %v1523, %v1548
    %v1650 = vmax.f32 %v1649, %v1573
    %v1651 = vmax.f32 %v1650, %v1598
    %v1652 = vmax.f32 %v1651, %v1623
    %v1653 = vmax.f32 %v1652, %v1648
    %v1654 = vsub.f32 %v1523, %v1653
    %v1655 = vmul.f32 %v1654, 1.442695
    %v1656 = vpow.pop %v1655
    %v1657 = vsub.f32 %v1548, %v1653
    %v1658 = vmul.f32 %v1657, 1.442695
    %v1659 = vpow.pop %v1658
    %v1660 = vsub.f32 %v1573, %v1653
    %v1661 = vmul.f32 %v1660, 1.442695
    %v1662 = vpow.pop %v1661
    %v1663 = vsub.f32 %v1598, %v1653
    %v1664 = vmul.f32 %v1663, 1.442695
    %v1665 = vpow.pop %v1664
    %v1666 = vsub.f32 %v1623, %v1653
    %v1667 = vmul.f32 %v1666, 1.442695
    %v1668 = vpow.pop %v1667
    %v1669 = vsub.f32 %v1648, %v1653
    %v1670 = vmul.f32 %v1669, 1.442695
    %v1671 = vpow.pop %v1670
    %v1672 = vadd.f32 %v1656, %v1659
    %v1673 = vadd.f32 %v1672, %v1662
    %v1674 = vadd.f32 %v1673, %v1665
    %v1675 = vadd.f32 %v1674, %v1668
    %v1676 = vadd.f32 %v1675, %v1671
    %v1677 = vrcp.pop %v1676
    %v1678 = vmul.f32 %v1676, %v1677
    %v1679 = vsub.f32 1.0, %v1678
    %v1680 = vmul.f32 %v1677, %v1679
    %v1681 = vadd.f32 %v1677, %v1680
    %vm1682 = vweird.f32 %v1676
    %vm1683 = vweird.f32 %v1677
    %vm1684 = vmor %vm1682, %vm1683
    %v1685 = vsel %vm1684, %v1677, %v1681
    %v1686 = vand.u32 2147483647, %v1676
    %vm1687 = vcmp.eq.f32.partialorder %v1686, 8.507059e+37
    %v1688 = vand.u32 %v1676, 2147483648
    %v1689 = vor.u32 1.1754944e-38, %v1688
    %v1690 = vsel %vm1687, %v1689, %v1685
    %v1691 = vmul.f32 %v1656, %v1690
    %v1692 = vsub.f32 %v1691, 0.16666667
    %v1693 = vsel %vm176, 0.0, %v1692
    %v1694 = vmul.f32 %v1693, %v1693
    %v1696 = vrot.slane %v1694, 7
    %v1697 = vrot.slane %v1696, 4
    %v1699 = vadd.f32 %v1498, %v1697
    %v1700 = vmul.f32 %v1659, %v1690
    %v1701 = vsub.f32 %v1700, 0.16666667
    %v1702 = vsel %vm177, 0.0, %v1701
    %v1703 = vmul.f32 %v1702, %v1702
    %v1705 = vrot.slane %v1703, 7
    %v1706 = vrot.slane %v1705, 4
    %v1708 = vadd.f32 %v1699, %v1706
    %v1709 = vmul.f32 %v1662, %v1690
    %v1710 = vsub.f32 %v1709, 0.16666667
    %v1711 = vsel %vm178, 0.0, %v1710
    %v1712 = vmul.f32 %v1711, %v1711
    %v1714 = vrot.slane %v1712, 7
    %v1715 = vrot.slane %v1714, 4
    %v1717 = vadd.f32 %v1708, %v1715
    %v1718 = vmul.f32 %v1665, %v1690
    %v1719 = vsub.f32 %v1718, 0.16666667
    %v1720 = vsel %vm179, 0.0, %v1719
    %v1721 = vmul.f32 %v1720, %v1720
    %v1723 = vrot.slane %v1721, 7
    %v1724 = vrot.slane %v1723, 4
    %v1726 = vadd.f32 %v1717, %v1724
    %v1727 = vmul.f32 %v1668, %v1690
    %v1728 = vsub.f32 %v1727, 0.16666667
    %v1729 = vsel %vm180, 0.0, %v1728
    %v1730 = vmul.f32 %v1729, %v1729
    %v1732 = vrot.slane %v1730, 7
    %v1733 = vrot.slane %v1732, 4
    %v1735 = vadd.f32 %v1726, %v1733
    %v1736 = vmul.f32 %v1671, %v1690
    %v1737 = vsub.f32 %v1736, 0.16666667
    %v1738 = vsel %vm181, 0.0, %v1737
    %v1739 = vmul.f32 %v1738, %v1738
    %v1741 = vrot.slane %v1739, 7
    %v1742 = vrot.slane %v1741, 4
    %v1744 = vadd.f32 %v1735, %v1742
    %v1745 = vld [vmem:[#allocation4] sm:$0x3]
    %v1747 = vrot.slane %v1744, 3
    %v1748 = vsel %vm764, %v1744, %v1747
    %v1750 = vadd.f32 %v1745, %v1748
    %1751 = vst.msk [vmem:[#allocation4] sm:$0x3] %vm771, %v1750
    // Predicated region
    $region22: #{tpu_custom_call.1} parent=1 // pred_check
      %p1752 = pneg %p67
    $region23: #{tpu_custom_call.1} parent=1 // pred_check_branch
      %1754 = sbr.rel (%p1752) target = $region25
    $region24: #{tpu_custom_call.1} parent=1 // pred_region
      %v1755 = vld [vmem:[#allocation2] sm:$0xff]
      %v1756 = vld [vmem:[#allocation2 + $0x8] sm:$0xff]
      %v1757 = vadd.f32 %v1755, %v1756
      %1758 = vadd.xlane.f32.xlu0 %v1757
      %v1759 = vpop.xlane.xlu0 %1758
      %v1760 = vrot.slane %v1759, 4
      %v1761 = vadd.f32 %v1759, %v1760
      %v1762 = vrot.slane %v1761, 2
      %v1763 = vadd.f32 %v1761, %v1762
      %v1764 = vrot.slane %v1763, 1
      %v1765 = vadd.f32 %v1763, %v1764
      %s1766 = vtos %v1765
      %v1767 = vstv %s1766
      %vm1768 = vcmask 0
      %1769 = vst.msk [vmem:[#allocation12] sm:$0x1] %vm1768, %v1767
      %v1770 = vld [vmem:[#allocation3] sm:$0x3]
      %v1772 = vperm.slane %v1770, 0
      %v1773 = vperm.slane %v1770, 1
      %v1776 = vsel %vm764, %v1772, 0.0
      %v1777 = vsel %vm764, %v1773, 0.0
      %v1778 = vadd.f32 %v1776, %v1777
      %1779 = vadd.xlane.f32.xlu0 %v1778
      %v1780 = vpop.xlane.xlu0 %1779
      %v1781 = vrot.slane %v1780, 4
      %v1782 = vadd.f32 %v1780, %v1781
      %v1783 = vrot.slane %v1782, 2
      %v1784 = vadd.f32 %v1782, %v1783
      %v1785 = vrot.slane %v1784, 1
      %v1786 = vadd.f32 %v1784, %v1785
      %s1787 = vtos %v1786
      %s1788 = smul.f32 %s1787, 0.16666667
      %v1789 = vstv %s1788
      %1790 = vst.msk [vmem:[#allocation13] sm:$0x1] %vm1768, %v1789
      %v1791 = vld [vmem:[#allocation4] sm:$0x3]
      %v1793 = vperm.slane %v1791, 0
      %v1794 = vperm.slane %v1791, 1
      %v1797 = vsel %vm764, %v1793, 0.0
      %v1798 = vsel %vm764, %v1794, 0.0
      %v1799 = vadd.f32 %v1797, %v1798
      %1800 = vadd.xlane.f32.xlu0 %v1799
      %v1801 = vpop.xlane.xlu0 %1800
      %v1802 = vrot.slane %v1801, 4
      %v1803 = vadd.f32 %v1801, %v1802
      %v1804 = vrot.slane %v1803, 2
      %v1805 = vadd.f32 %v1803, %v1804
      %v1806 = vrot.slane %v1805, 1
      %v1807 = vadd.f32 %v1805, %v1806
      %s1808 = vtos %v1807
      %v1809 = vstv %s1808
      %1810 = vst.msk [vmem:[#allocation15] sm:$0x1] %vm1768, %v1809
    $region25: #{tpu_custom_call.1} parent=1 // pred_fallthru
      _
    // Predicated region
    $region26: #{tpu_custom_call.1} parent=1 // pred_check
      _
    $region27: #{tpu_custom_call.1} parent=1 // pred_check_branch
      %1812 = sbr.rel (0) target = $region29
    $region28: #{tpu_custom_call.1} parent=1 // pred_region
      %1814 = vsyncadd [#allocation9], 0
      %s1816 = sshll.u32 [#allocation12], 4
      %s1817 = int_to_ptr.vmem [resolvable:$true] %s1816
      %s1818 = sshll.u32 %s3, 4
      %s1819 = int_to_ptr.hbm [resolvable:$true] %s1818
      %1821 = dma.vmem_to_hbm [thread:$0]  %s1817, 16, %s1819, [#allocation9]
    $region29: #{tpu_custom_call.1} parent=1 // pred_fallthru
      _
    // Predicated region
    $region30: #{tpu_custom_call.1} parent=1 // pred_check
      _
    $region31: #{tpu_custom_call.1} parent=1 // pred_check_branch
      %1823 = sbr.rel (0) target = $region33
    $region32: #{tpu_custom_call.1} parent=1 // pred_region
      %1825 = vsyncadd [#allocation14], 0
      %s1827 = sshll.u32 [#allocation13], 4
      %s1828 = int_to_ptr.vmem [resolvable:$true] %s1827
      %s1829 = sshll.u32 %s4, 4
      %s1830 = int_to_ptr.hbm [resolvable:$true] %s1829
      %1832 = dma.vmem_to_hbm [thread:$0]  %s1828, 16, %s1830, [#allocation14]
    $region33: #{tpu_custom_call.1} parent=1 // pred_fallthru
      _
    // Predicated region
    $region34: #{tpu_custom_call.1} parent=1 // pred_check
      _
    $region35: #{tpu_custom_call.1} parent=1 // pred_check_branch
      %1834 = sbr.rel (0) target = $region37
    $region36: #{tpu_custom_call.1} parent=1 // pred_region
      %1836 = vsyncadd [#allocation14], 0
      %s1838 = sshll.u32 [#allocation15], 4
      %s1839 = int_to_ptr.vmem [resolvable:$true] %s1838
      %s1840 = sshll.u32 %s5, 4
      %s1841 = int_to_ptr.hbm [resolvable:$true] %s1840
      %1843 = dma.vmem_to_hbm [thread:$0]  %s1839, 16, %s1841, [#allocation14]
    $region37: #{tpu_custom_call.1} parent=1 // pred_fallthru
      _
    // Predicated region
    $region38: #{tpu_custom_call.1} parent=1 // pred_check
      _
    $region39: #{tpu_custom_call.1} parent=1 // pred_check_branch
      %1845 = sbr.rel (0) target = $region41
    $region40: #{tpu_custom_call.1} parent=1 // pred_region
      %1847 = dma.done [#allocation9], 16
    $region41: #{tpu_custom_call.1} parent=1 // pred_fallthru
      _
    // Predicated region
    $region42: #{tpu_custom_call.1} parent=1 // pred_check
      _
    $region43: #{tpu_custom_call.1} parent=1 // pred_check_branch
      %1849 = sbr.rel (0) target = $region45
    $region44: #{tpu_custom_call.1} parent=1 // pred_region
      %1851 = dma.done [#allocation14], 16
    $region45: #{tpu_custom_call.1} parent=1 // pred_fallthru
      _
    // Predicated region
    $region46: #{tpu_custom_call.1} parent=1 // pred_check
      _
    $region47: #{tpu_custom_call.1} parent=1 // pred_check_branch
      %1853 = sbr.rel (0) target = $region49
    $region48: #{tpu_custom_call.1} parent=1 // pred_region
      %1855 = dma.done [#allocation14], 16
    $region49: #{tpu_custom_call.1} parent=1 // pred_fallthru
      _
    %1856 = vsyncpa [#allocation8], 1
    %1857 = vsyncpa [#allocation11], 1
    %1858 = vsyncpa [#allocation9], 1
    %1859 = vsyncpa [#allocation14], 1

</llo_original>
